<compile_context>
chip_gen: v7x
topology: tpu7x:2x2x1
jax: 0.10.0
libtpu: 0.0.40
codegen_flags: <defaults>
</compile_context>

<pallas_src>
import functools

import jax
import jax.numpy as jnp
from jax.experimental import pallas as pl
from jax.experimental.pallas import tpu as pltpu  # noqa: F401  (not needed for this tiny kernel)

D = 10
H = 15
N = 1
O = 10
T = 10

# Packed-parameter layout: each block starts on an 8-sublane-aligned row so the
# in-kernel static slices start on a tile boundary.
_BLOCK_ROWS = 16   # room for up to 16 rows per weight block (D=10, H=15 fit)
_Y0_ROWS = 8
_OFF_ENC_WXH = 0 * _BLOCK_ROWS
_OFF_ENC_WHH = 1 * _BLOCK_ROWS
_OFF_DEC_WXH = 2 * _BLOCK_ROWS
_OFF_DEC_WHH = 3 * _BLOCK_ROWS
_OFF_DEC_WHO = 4 * _BLOCK_ROWS
_OFF_Y0 = 5 * _BLOCK_ROWS
_PACKED_ROWS = 5 * _BLOCK_ROWS + _Y0_ROWS   # 88


def _make_kernel(t_steps, d, h, o):
    """Kernel factory; all sizes are static (trace-time) Python ints."""

    def kernel(x_ref, w_ref, out_ref):
        # x_ref:   (T, D)             f32
        # w_ref:   (_PACKED_ROWS, C)  f32, C = max(H, O, D)
        # out_ref: (T, O)             f32
        x = x_ref[...]                                            # (T, D)
        enc_wxh = w_ref[_OFF_ENC_WXH:_OFF_ENC_WXH + d, :h]        # (D, H)
        enc_whh = w_ref[_OFF_ENC_WHH:_OFF_ENC_WHH + h, :h]        # (H, H)
        dec_wxh = w_ref[_OFF_DEC_WXH:_OFF_DEC_WXH + d, :h]        # (D, H)
        dec_whh = w_ref[_OFF_DEC_WHH:_OFF_DEC_WHH + h, :h]        # (H, H)
        dec_who = w_ref[_OFF_DEC_WHO:_OFF_DEC_WHO + h, :o]        # (H, O)
        y0 = w_ref[_OFF_Y0:_OFF_Y0 + 1, :d]                       # (1, D)

        dot = functools.partial(jnp.dot, preferred_element_type=jnp.float32)

        # (1) Hoisted encoder input projection: one batched matmul removes the
        #     data-independent half of the encoder MXU ops from the serial chain.
        x_proj = dot(x, enc_wxh)                                  # (T, H)

        # (2) Fused decoder recurrence matrix (computed once, off the chain):
        #     for t >= 1,  y_{t-1} @ Wxh == s_{t-1} @ (Who @ Wxh).
        w_fused = dec_whh + dot(dec_who, dec_wxh)                 # (H, H)

        # Encoder: h starts at zeros (identical to torch.zeros(H) broadcast).
        hstate = jnp.zeros((1, h), jnp.float32)
        for t in range(t_steps):
            hstate = jax.nn.sigmoid(x_proj[t:t + 1, :] + dot(hstate, enc_whh))

        # Decoder: step 0 on the original (y0, h) path; later steps are one
        # HxH matmul each against the fused matrix.
        s = jax.nn.sigmoid(dot(y0, dec_wxh) + dot(hstate, dec_whh))
        states = [s]
        for _ in range(1, t_steps):
            s = jax.nn.sigmoid(dot(s, w_fused))
            states.append(s)

        # (3) Batched output projection + single full-block store.
        s_all = jnp.concatenate(states, axis=0)                   # (T, H)
        out_ref[...] = dot(s_all, dec_who)                        # (T, O)

    return kernel


def _pad_block(a, rows, cols):
    r, c = a.shape
    return jnp.pad(a.astype(jnp.float32), ((0, rows - r), (0, cols - c)))


def _pack_params(y0, enc_wxh, enc_whh, dec_wxh, dec_whh, dec_who):
    cols = max(enc_wxh.shape[1], dec_who.shape[1], y0.shape[1])
    blocks = [
        _pad_block(enc_wxh, _BLOCK_ROWS, cols),
        _pad_block(enc_whh, _BLOCK_ROWS, cols),
        _pad_block(dec_wxh, _BLOCK_ROWS, cols),
        _pad_block(dec_whh, _BLOCK_ROWS, cols),
        _pad_block(dec_who, _BLOCK_ROWS, cols),
        _pad_block(y0, _Y0_ROWS, cols),
    ]
    return jnp.concatenate(blocks, axis=0)                        # (_PACKED_ROWS, cols)


def seq2seq_forward(x, y0, enc_wxh, enc_whh, dec_wxh, dec_whh, dec_who):
    n, t_steps, d = x.shape
    assert n == 1, "kernel assumes batch size 1 (as in the module spec)"
    h = enc_wxh.shape[1]
    o = dec_who.shape[1]
    assert d <= _BLOCK_ROWS and h <= _BLOCK_ROWS and y0.shape[0] == 1

    x2d = x.reshape(t_steps, d).astype(jnp.float32)               # drop the N=1 dim
    packed = _pack_params(y0, enc_wxh, enc_whh, dec_wxh, dec_whh, dec_who)

    full = lambda shape: pl.BlockSpec(shape, lambda: (0,) * len(shape))
    y2d = pl.pallas_call(
        _make_kernel(t_steps, d, h, o),
        out_shape=jax.ShapeDtypeStruct((t_steps, o), jnp.float32),
        grid=(),
        in_specs=[full(x2d.shape), full(packed.shape)],
        out_specs=full((t_steps, o)),
    )(x2d, packed)
    # Match torch.stack(y) -> (T, N, O).
    return y2d.reshape(t_steps, n, o)


def seq2seq_reference(x, y0, enc_wxh, enc_whh, dec_wxh, dec_whh, dec_who):
    """Plain-JAX reference mirroring the PyTorch forward (unfused math)."""
    n, t_steps, _ = x.shape
    h = jnp.zeros((n, enc_wxh.shape[1]), jnp.float32)
    for t in range(t_steps):
        h = jax.nn.sigmoid(x[:, t, :] @ enc_wxh + h @ enc_whh)
    s = h
    y_i = y0
    ys = []
    for _ in range(t_steps):
        s = jax.nn.sigmoid(y_i @ dec_wxh + s @ dec_whh)
        y_i = s @ dec_who
        ys.append(y_i)
    return jnp.stack(ys)


if __name__ == "__main__":
    key = jax.random.PRNGKey(0)
    k_x, k_y0, k1, k2, k3, k4, k5 = jax.random.split(key, 7)

    # Deterministic "parameters" (the PyTorch module draws them from N(0, 1)).
    enc_wxh = jax.random.normal(k1, (D, H), jnp.float32)
    enc_whh = jax.random.normal(k2, (H, H), jnp.float32)
    dec_wxh = jax.random.normal(k3, (D, H), jnp.float32)
    dec_whh = jax.random.normal(k4, (H, H), jnp.float32)
    dec_who = jax.random.normal(k5, (H, O), jnp.float32)

    # Inputs.  y0 stands in for the torch.normal(0, 1, (1, D)) drawn inside
    # forward(); it is generated deterministically here for reproducibility.
    x = jax.random.normal(k_x, (N, T, D), jnp.float32)
    y0 = jax.random.normal(k_y0, (1, D), jnp.float32)

    y_hat = seq2seq_forward(x, y0, enc_wxh, enc_whh, dec_wxh, dec_whh, dec_who)
    y_hat = jax.block_until_ready(y_hat)

    y_ref = seq2seq_reference(x, y0, enc_wxh, enc_whh, dec_wxh, dec_whh, dec_who)
    assert y_hat.shape == (T, N, O), y_hat.shape
    # Fused decoder re-associates f32 accumulation -> allow a slightly looser tol.
    assert jnp.allclose(y_hat, y_ref, atol=1e-4, rtol=1e-4), "mismatch vs reference"

    print("KERNEL_OK")
</pallas_src>

<mosaic_0001>
module attributes {stable_mosaic.version = 11 : i64} {
  func.func @kernel(%arg0: memref<10x10xf32, #tpu.memory_space<vmem>>, %arg1: memref<88x15xf32, #tpu.memory_space<vmem>>, %arg2: memref<10x10xf32, #tpu.memory_space<vmem>>) attributes {dimension_semantics = [], scalar_prefetch = 0 : i64, scratch_operands = 0 : i64, tpu.core_type = #tpu.core_type<tc>} {
    %c0 = arith.constant 0 : index
    %c0_0 = arith.constant 0 : index
    %0 = vector.load %arg0[%c0, %c0_0] : memref<10x10xf32, #tpu.memory_space<vmem>>, vector<10x10xf32>
    %c0_1 = arith.constant 0 : index
    %c0_2 = arith.constant 0 : index
    %1 = vector.load %arg1[%c0_1, %c0_2] : memref<88x15xf32, #tpu.memory_space<vmem>>, vector<10x15xf32>
    %c16 = arith.constant 16 : index
    %c0_3 = arith.constant 0 : index
    %2 = vector.load %arg1[%c16, %c0_3] : memref<88x15xf32, #tpu.memory_space<vmem>>, vector<15x15xf32>
    %c32 = arith.constant 32 : index
    %c0_4 = arith.constant 0 : index
    %3 = vector.load %arg1[%c32, %c0_4] : memref<88x15xf32, #tpu.memory_space<vmem>>, vector<10x15xf32>
    %c48 = arith.constant 48 : index
    %c0_5 = arith.constant 0 : index
    %4 = vector.load %arg1[%c48, %c0_5] : memref<88x15xf32, #tpu.memory_space<vmem>>, vector<15x15xf32>
    %c64 = arith.constant 64 : index
    %c0_6 = arith.constant 0 : index
    %5 = vector.load %arg1[%c64, %c0_6] : memref<88x15xf32, #tpu.memory_space<vmem>>, vector<15x10xf32>
    %c80 = arith.constant 80 : index
    %c0_7 = arith.constant 0 : index
    %6 = vector.load %arg1[%c80, %c0_7] : memref<88x15xf32, #tpu.memory_space<vmem>>, vector<1x10xf32>
    %cst = arith.constant dense<0.000000e+00> : vector<10x15xf32>
    %7 = tpu.matmul %0, %1, %cst {dimension_numbers = #tpu.dot_dimension_numbers<[1], [0], [0], [1], [0, 0, 1, 1], [], []>} : vector<10x10xf32>, vector<10x15xf32>, vector<10x15xf32> -> vector<10x15xf32>
    %cst_8 = arith.constant dense<0.000000e+00> : vector<15x15xf32>
    %8 = tpu.matmul %5, %3, %cst_8 {dimension_numbers = #tpu.dot_dimension_numbers<[1], [0], [0], [1], [0, 0, 1, 1], [], []>} : vector<15x10xf32>, vector<10x15xf32>, vector<15x15xf32> -> vector<15x15xf32>
    %9 = arith.addf %4, %8 : vector<15x15xf32>
    %cst_9 = arith.constant 0.000000e+00 : f32
    %10 = vector.broadcast %cst_9 : f32 to vector<1x15xf32>
    %11 = vector.extract_strided_slice %7 {offsets = [0, 0], sizes = [1, 15], strides = [1, 1]} : vector<10x15xf32> to vector<1x15xf32>
    %cst_10 = arith.constant dense<0.000000e+00> : vector<1x15xf32>
    %12 = tpu.matmul %10, %2, %cst_10 {dimension_numbers = #tpu.dot_dimension_numbers<[1], [0], [0], [1], [0, 0, 1, 1], [], []>} : vector<1x15xf32>, vector<15x15xf32>, vector<1x15xf32> -> vector<1x15xf32>
    %13 = arith.addf %11, %12 : vector<1x15xf32>
    %14 = arith.negf %13 : vector<1x15xf32>
    %15 = math.exp %14 : vector<1x15xf32>
    %cst_11 = arith.constant 1.000000e+00 : f32
    %16 = vector.broadcast %cst_11 : f32 to vector<1x15xf32>
    %17 = arith.addf %16, %15 : vector<1x15xf32>
    %18 = arith.divf %16, %17 : vector<1x15xf32>
    %19 = vector.extract_strided_slice %7 {offsets = [1, 0], sizes = [1, 15], strides = [1, 1]} : vector<10x15xf32> to vector<1x15xf32>
    %cst_12 = arith.constant dense<0.000000e+00> : vector<1x15xf32>
    %20 = tpu.matmul %18, %2, %cst_12 {dimension_numbers = #tpu.dot_dimension_numbers<[1], [0], [0], [1], [0, 0, 1, 1], [], []>} : vector<1x15xf32>, vector<15x15xf32>, vector<1x15xf32> -> vector<1x15xf32>
    %21 = arith.addf %19, %20 : vector<1x15xf32>
    %22 = arith.negf %21 : vector<1x15xf32>
    %23 = math.exp %22 : vector<1x15xf32>
    %cst_13 = arith.constant 1.000000e+00 : f32
    %24 = vector.broadcast %cst_13 : f32 to vector<1x15xf32>
    %25 = arith.addf %24, %23 : vector<1x15xf32>
    %26 = arith.divf %24, %25 : vector<1x15xf32>
    %27 = vector.extract_strided_slice %7 {offsets = [2, 0], sizes = [1, 15], strides = [1, 1]} : vector<10x15xf32> to vector<1x15xf32>
    %cst_14 = arith.constant dense<0.000000e+00> : vector<1x15xf32>
    %28 = tpu.matmul %26, %2, %cst_14 {dimension_numbers = #tpu.dot_dimension_numbers<[1], [0], [0], [1], [0, 0, 1, 1], [], []>} : vector<1x15xf32>, vector<15x15xf32>, vector<1x15xf32> -> vector<1x15xf32>
    %29 = arith.addf %27, %28 : vector<1x15xf32>
    %30 = arith.negf %29 : vector<1x15xf32>
    %31 = math.exp %30 : vector<1x15xf32>
    %cst_15 = arith.constant 1.000000e+00 : f32
    %32 = vector.broadcast %cst_15 : f32 to vector<1x15xf32>
    %33 = arith.addf %32, %31 : vector<1x15xf32>
    %34 = arith.divf %32, %33 : vector<1x15xf32>
    %35 = vector.extract_strided_slice %7 {offsets = [3, 0], sizes = [1, 15], strides = [1, 1]} : vector<10x15xf32> to vector<1x15xf32>
    %cst_16 = arith.constant dense<0.000000e+00> : vector<1x15xf32>
    %36 = tpu.matmul %34, %2, %cst_16 {dimension_numbers = #tpu.dot_dimension_numbers<[1], [0], [0], [1], [0, 0, 1, 1], [], []>} : vector<1x15xf32>, vector<15x15xf32>, vector<1x15xf32> -> vector<1x15xf32>
    %37 = arith.addf %35, %36 : vector<1x15xf32>
    %38 = arith.negf %37 : vector<1x15xf32>
    %39 = math.exp %38 : vector<1x15xf32>
    %cst_17 = arith.constant 1.000000e+00 : f32
    %40 = vector.broadcast %cst_17 : f32 to vector<1x15xf32>
    %41 = arith.addf %40, %39 : vector<1x15xf32>
    %42 = arith.divf %40, %41 : vector<1x15xf32>
    %43 = vector.extract_strided_slice %7 {offsets = [4, 0], sizes = [1, 15], strides = [1, 1]} : vector<10x15xf32> to vector<1x15xf32>
    %cst_18 = arith.constant dense<0.000000e+00> : vector<1x15xf32>
    %44 = tpu.matmul %42, %2, %cst_18 {dimension_numbers = #tpu.dot_dimension_numbers<[1], [0], [0], [1], [0, 0, 1, 1], [], []>} : vector<1x15xf32>, vector<15x15xf32>, vector<1x15xf32> -> vector<1x15xf32>
    %45 = arith.addf %43, %44 : vector<1x15xf32>
    %46 = arith.negf %45 : vector<1x15xf32>
    %47 = math.exp %46 : vector<1x15xf32>
    %cst_19 = arith.constant 1.000000e+00 : f32
    %48 = vector.broadcast %cst_19 : f32 to vector<1x15xf32>
    %49 = arith.addf %48, %47 : vector<1x15xf32>
    %50 = arith.divf %48, %49 : vector<1x15xf32>
    %51 = vector.extract_strided_slice %7 {offsets = [5, 0], sizes = [1, 15], strides = [1, 1]} : vector<10x15xf32> to vector<1x15xf32>
    %cst_20 = arith.constant dense<0.000000e+00> : vector<1x15xf32>
    %52 = tpu.matmul %50, %2, %cst_20 {dimension_numbers = #tpu.dot_dimension_numbers<[1], [0], [0], [1], [0, 0, 1, 1], [], []>} : vector<1x15xf32>, vector<15x15xf32>, vector<1x15xf32> -> vector<1x15xf32>
    %53 = arith.addf %51, %52 : vector<1x15xf32>
    %54 = arith.negf %53 : vector<1x15xf32>
    %55 = math.exp %54 : vector<1x15xf32>
    %cst_21 = arith.constant 1.000000e+00 : f32
    %56 = vector.broadcast %cst_21 : f32 to vector<1x15xf32>
    %57 = arith.addf %56, %55 : vector<1x15xf32>
    %58 = arith.divf %56, %57 : vector<1x15xf32>
    %59 = vector.extract_strided_slice %7 {offsets = [6, 0], sizes = [1, 15], strides = [1, 1]} : vector<10x15xf32> to vector<1x15xf32>
    %cst_22 = arith.constant dense<0.000000e+00> : vector<1x15xf32>
    %60 = tpu.matmul %58, %2, %cst_22 {dimension_numbers = #tpu.dot_dimension_numbers<[1], [0], [0], [1], [0, 0, 1, 1], [], []>} : vector<1x15xf32>, vector<15x15xf32>, vector<1x15xf32> -> vector<1x15xf32>
    %61 = arith.addf %59, %60 : vector<1x15xf32>
    %62 = arith.negf %61 : vector<1x15xf32>
    %63 = math.exp %62 : vector<1x15xf32>
    %cst_23 = arith.constant 1.000000e+00 : f32
    %64 = vector.broadcast %cst_23 : f32 to vector<1x15xf32>
    %65 = arith.addf %64, %63 : vector<1x15xf32>
    %66 = arith.divf %64, %65 : vector<1x15xf32>
    %67 = vector.extract_strided_slice %7 {offsets = [7, 0], sizes = [1, 15], strides = [1, 1]} : vector<10x15xf32> to vector<1x15xf32>
    %cst_24 = arith.constant dense<0.000000e+00> : vector<1x15xf32>
    %68 = tpu.matmul %66, %2, %cst_24 {dimension_numbers = #tpu.dot_dimension_numbers<[1], [0], [0], [1], [0, 0, 1, 1], [], []>} : vector<1x15xf32>, vector<15x15xf32>, vector<1x15xf32> -> vector<1x15xf32>
    %69 = arith.addf %67, %68 : vector<1x15xf32>
    %70 = arith.negf %69 : vector<1x15xf32>
    %71 = math.exp %70 : vector<1x15xf32>
    %cst_25 = arith.constant 1.000000e+00 : f32
    %72 = vector.broadcast %cst_25 : f32 to vector<1x15xf32>
    %73 = arith.addf %72, %71 : vector<1x15xf32>
    %74 = arith.divf %72, %73 : vector<1x15xf32>
    %75 = vector.extract_strided_slice %7 {offsets = [8, 0], sizes = [1, 15], strides = [1, 1]} : vector<10x15xf32> to vector<1x15xf32>
    %cst_26 = arith.constant dense<0.000000e+00> : vector<1x15xf32>
    %76 = tpu.matmul %74, %2, %cst_26 {dimension_numbers = #tpu.dot_dimension_numbers<[1], [0], [0], [1], [0, 0, 1, 1], [], []>} : vector<1x15xf32>, vector<15x15xf32>, vector<1x15xf32> -> vector<1x15xf32>
    %77 = arith.addf %75, %76 : vector<1x15xf32>
    %78 = arith.negf %77 : vector<1x15xf32>
    %79 = math.exp %78 : vector<1x15xf32>
    %cst_27 = arith.constant 1.000000e+00 : f32
    %80 = vector.broadcast %cst_27 : f32 to vector<1x15xf32>
    %81 = arith.addf %80, %79 : vector<1x15xf32>
    %82 = arith.divf %80, %81 : vector<1x15xf32>
    %83 = vector.extract_strided_slice %7 {offsets = [9, 0], sizes = [1, 15], strides = [1, 1]} : vector<10x15xf32> to vector<1x15xf32>
    %cst_28 = arith.constant dense<0.000000e+00> : vector<1x15xf32>
    %84 = tpu.matmul %82, %2, %cst_28 {dimension_numbers = #tpu.dot_dimension_numbers<[1], [0], [0], [1], [0, 0, 1, 1], [], []>} : vector<1x15xf32>, vector<15x15xf32>, vector<1x15xf32> -> vector<1x15xf32>
    %85 = arith.addf %83, %84 : vector<1x15xf32>
    %86 = arith.negf %85 : vector<1x15xf32>
    %87 = math.exp %86 : vector<1x15xf32>
    %cst_29 = arith.constant 1.000000e+00 : f32
    %88 = vector.broadcast %cst_29 : f32 to vector<1x15xf32>
    %89 = arith.addf %88, %87 : vector<1x15xf32>
    %90 = arith.divf %88, %89 : vector<1x15xf32>
    %cst_30 = arith.constant dense<0.000000e+00> : vector<1x15xf32>
    %91 = tpu.matmul %6, %3, %cst_30 {dimension_numbers = #tpu.dot_dimension_numbers<[1], [0], [0], [1], [0, 0, 1, 1], [], []>} : vector<1x10xf32>, vector<10x15xf32>, vector<1x15xf32> -> vector<1x15xf32>
    %cst_31 = arith.constant dense<0.000000e+00> : vector<1x15xf32>
    %92 = tpu.matmul %90, %4, %cst_31 {dimension_numbers = #tpu.dot_dimension_numbers<[1], [0], [0], [1], [0, 0, 1, 1], [], []>} : vector<1x15xf32>, vector<15x15xf32>, vector<1x15xf32> -> vector<1x15xf32>
    %93 = arith.addf %91, %92 : vector<1x15xf32>
    %94 = arith.negf %93 : vector<1x15xf32>
    %95 = math.exp %94 : vector<1x15xf32>
    %cst_32 = arith.constant 1.000000e+00 : f32
    %96 = vector.broadcast %cst_32 : f32 to vector<1x15xf32>
    %97 = arith.addf %96, %95 : vector<1x15xf32>
    %98 = arith.divf %96, %97 : vector<1x15xf32>
    %cst_33 = arith.constant dense<0.000000e+00> : vector<1x15xf32>
    %99 = tpu.matmul %98, %9, %cst_33 {dimension_numbers = #tpu.dot_dimension_numbers<[1], [0], [0], [1], [0, 0, 1, 1], [], []>} : vector<1x15xf32>, vector<15x15xf32>, vector<1x15xf32> -> vector<1x15xf32>
    %100 = arith.negf %99 : vector<1x15xf32>
    %101 = math.exp %100 : vector<1x15xf32>
    %cst_34 = arith.constant 1.000000e+00 : f32
    %102 = vector.broadcast %cst_34 : f32 to vector<1x15xf32>
    %103 = arith.addf %102, %101 : vector<1x15xf32>
    %104 = arith.divf %102, %103 : vector<1x15xf32>
    %cst_35 = arith.constant dense<0.000000e+00> : vector<1x15xf32>
    %105 = tpu.matmul %104, %9, %cst_35 {dimension_numbers = #tpu.dot_dimension_numbers<[1], [0], [0], [1], [0, 0, 1, 1], [], []>} : vector<1x15xf32>, vector<15x15xf32>, vector<1x15xf32> -> vector<1x15xf32>
    %106 = arith.negf %105 : vector<1x15xf32>
    %107 = math.exp %106 : vector<1x15xf32>
    %cst_36 = arith.constant 1.000000e+00 : f32
    %108 = vector.broadcast %cst_36 : f32 to vector<1x15xf32>
    %109 = arith.addf %108, %107 : vector<1x15xf32>
    %110 = arith.divf %108, %109 : vector<1x15xf32>
    %cst_37 = arith.constant dense<0.000000e+00> : vector<1x15xf32>
    %111 = tpu.matmul %110, %9, %cst_37 {dimension_numbers = #tpu.dot_dimension_numbers<[1], [0], [0], [1], [0, 0, 1, 1], [], []>} : vector<1x15xf32>, vector<15x15xf32>, vector<1x15xf32> -> vector<1x15xf32>
    %112 = arith.negf %111 : vector<1x15xf32>
    %113 = math.exp %112 : vector<1x15xf32>
    %cst_38 = arith.constant 1.000000e+00 : f32
    %114 = vector.broadcast %cst_38 : f32 to vector<1x15xf32>
    %115 = arith.addf %114, %113 : vector<1x15xf32>
    %116 = arith.divf %114, %115 : vector<1x15xf32>
    %cst_39 = arith.constant dense<0.000000e+00> : vector<1x15xf32>
    %117 = tpu.matmul %116, %9, %cst_39 {dimension_numbers = #tpu.dot_dimension_numbers<[1], [0], [0], [1], [0, 0, 1, 1], [], []>} : vector<1x15xf32>, vector<15x15xf32>, vector<1x15xf32> -> vector<1x15xf32>
    %118 = arith.negf %117 : vector<1x15xf32>
    %119 = math.exp %118 : vector<1x15xf32>
    %cst_40 = arith.constant 1.000000e+00 : f32
    %120 = vector.broadcast %cst_40 : f32 to vector<1x15xf32>
    %121 = arith.addf %120, %119 : vector<1x15xf32>
    %122 = arith.divf %120, %121 : vector<1x15xf32>
    %cst_41 = arith.constant dense<0.000000e+00> : vector<1x15xf32>
    %123 = tpu.matmul %122, %9, %cst_41 {dimension_numbers = #tpu.dot_dimension_numbers<[1], [0], [0], [1], [0, 0, 1, 1], [], []>} : vector<1x15xf32>, vector<15x15xf32>, vector<1x15xf32> -> vector<1x15xf32>
    %124 = arith.negf %123 : vector<1x15xf32>
    %125 = math.exp %124 : vector<1x15xf32>
    %cst_42 = arith.constant 1.000000e+00 : f32
    %126 = vector.broadcast %cst_42 : f32 to vector<1x15xf32>
    %127 = arith.addf %126, %125 : vector<1x15xf32>
    %128 = arith.divf %126, %127 : vector<1x15xf32>
    %cst_43 = arith.constant dense<0.000000e+00> : vector<1x15xf32>
    %129 = tpu.matmul %128, %9, %cst_43 {dimension_numbers = #tpu.dot_dimension_numbers<[1], [0], [0], [1], [0, 0, 1, 1], [], []>} : vector<1x15xf32>, vector<15x15xf32>, vector<1x15xf32> -> vector<1x15xf32>
    %130 = arith.negf %129 : vector<1x15xf32>
    %131 = math.exp %130 : vector<1x15xf32>
    %cst_44 = arith.constant 1.000000e+00 : f32
    %132 = vector.broadcast %cst_44 : f32 to vector<1x15xf32>
    %133 = arith.addf %132, %131 : vector<1x15xf32>
    %134 = arith.divf %132, %133 : vector<1x15xf32>
    %cst_45 = arith.constant dense<0.000000e+00> : vector<1x15xf32>
    %135 = tpu.matmul %134, %9, %cst_45 {dimension_numbers = #tpu.dot_dimension_numbers<[1], [0], [0], [1], [0, 0, 1, 1], [], []>} : vector<1x15xf32>, vector<15x15xf32>, vector<1x15xf32> -> vector<1x15xf32>
    %136 = arith.negf %135 : vector<1x15xf32>
    %137 = math.exp %136 : vector<1x15xf32>
    %cst_46 = arith.constant 1.000000e+00 : f32
    %138 = vector.broadcast %cst_46 : f32 to vector<1x15xf32>
    %139 = arith.addf %138, %137 : vector<1x15xf32>
    %140 = arith.divf %138, %139 : vector<1x15xf32>
    %cst_47 = arith.constant dense<0.000000e+00> : vector<1x15xf32>
    %141 = tpu.matmul %140, %9, %cst_47 {dimension_numbers = #tpu.dot_dimension_numbers<[1], [0], [0], [1], [0, 0, 1, 1], [], []>} : vector<1x15xf32>, vector<15x15xf32>, vector<1x15xf32> -> vector<1x15xf32>
    %142 = arith.negf %141 : vector<1x15xf32>
    %143 = math.exp %142 : vector<1x15xf32>
    %cst_48 = arith.constant 1.000000e+00 : f32
    %144 = vector.broadcast %cst_48 : f32 to vector<1x15xf32>
    %145 = arith.addf %144, %143 : vector<1x15xf32>
    %146 = arith.divf %144, %145 : vector<1x15xf32>
    %cst_49 = arith.constant dense<0.000000e+00> : vector<1x15xf32>
    %147 = tpu.matmul %146, %9, %cst_49 {dimension_numbers = #tpu.dot_dimension_numbers<[1], [0], [0], [1], [0, 0, 1, 1], [], []>} : vector<1x15xf32>, vector<15x15xf32>, vector<1x15xf32> -> vector<1x15xf32>
    %148 = arith.negf %147 : vector<1x15xf32>
    %149 = math.exp %148 : vector<1x15xf32>
    %cst_50 = arith.constant 1.000000e+00 : f32
    %150 = vector.broadcast %cst_50 : f32 to vector<1x15xf32>
    %151 = arith.addf %150, %149 : vector<1x15xf32>
    %152 = arith.divf %150, %151 : vector<1x15xf32>
    %153 = tpu.concatenate %98, %104, %110, %116, %122, %128, %134, %140, %146, %152 in 0 : vector<1x15xf32>, vector<1x15xf32>, vector<1x15xf32>, vector<1x15xf32>, vector<1x15xf32>, vector<1x15xf32>, vector<1x15xf32>, vector<1x15xf32>, vector<1x15xf32>, vector<1x15xf32> -> vector<10x15xf32>
    %cst_51 = arith.constant dense<0.000000e+00> : vector<10x10xf32>
    %154 = tpu.matmul %153, %5, %cst_51 {dimension_numbers = #tpu.dot_dimension_numbers<[1], [0], [0], [1], [0, 0, 1, 1], [], []>} : vector<10x15xf32>, vector<15x10xf32>, vector<10x10xf32> -> vector<10x10xf32>
    %c0_52 = arith.constant 0 : index
    %c0_53 = arith.constant 0 : index
    %155 = vector.load %arg2[%c0_52, %c0_53] : memref<10x10xf32, #tpu.memory_space<vmem>>, vector<10x10xf32>
    tpu.vector_store %arg2[%c0_52, %c0_53], %154 {strides = array<i32>} : memref<10x10xf32, #tpu.memory_space<vmem>>, vector<10x10xf32>,
    return
  }
}

</mosaic_0001>

<llo_original>
// kernel: tpu_custom_call.1
$region0: #{tpu_custom_call.1}
  #allocation0 [shape = 'u32[]', space=smem, size = 0x4, offset = 0x4, fixed_abs, tag = 'smem constant byte address 0x4 - core index']
  #allocation1 [shape = 'u32[144,128]{1,0:T(1,128)}', space=vmem, size = 0x12000, scoped, tag = 'internal scratch']
  %s0 = inlined_call_operand.vmem [shape: f32[10,10], index: 0, kind: input, shape index: {}]
  %s1 = inlined_call_operand.vmem [shape: f32[88,15], index: 1, kind: input, shape index: {}]
  %s2 = inlined_call_operand.hbm [shape: f32[10,10], index: 2, kind: output, shape index: {}]
  %s3 = sld [smem:[#allocation0]]
  $region18: #{tpu_custom_call.1} parent=0
    _
  %s5 = ssub.s32 1, %s3
  %s6 = scalar_select 0, %s5, %s3
  $region1: #{tpu_custom_call.1} parent=0
    #allocation2 [shape = 'u8[8192]{0}', space=vmem, size = 0x2000, scoped, tag = 'output window, operand 0, single buffered']
    #allocation3 [shape = 's32[1]{0}', space=sflag, size = 0x4, scoped, tag = 'scoped memory for tpu_custom_call.1']
    %7 = vsyncpa [#allocation3], 0
    // Predicated region
    $region2: #{tpu_custom_call.1} parent=1 // pred_check
      _
    $region3: #{tpu_custom_call.1} parent=1 // pred_check_branch
      %9 = sbr.rel (0) target = $region5
    $region4: #{tpu_custom_call.1} parent=1 // pred_region
      _
    $region5: #{tpu_custom_call.1} parent=1 // pred_fallthru
      _
    // Predicated region
    $region6: #{tpu_custom_call.1} parent=1 // pred_check
      _
    $region7: #{tpu_custom_call.1} parent=1 // pred_check_branch
      %11 = sbr.rel (0) target = $region9
    $region8: #{tpu_custom_call.1} parent=1 // pred_region
      _
    $region9: #{tpu_custom_call.1} parent=1 // pred_fallthru
      _
    %v12 = vld [vmem:[%s0] sm:$0xff]
    %v13 = vld [vmem:[%s0 + $0x8] sm:$0x3]
    %v14 = vld [vmem:[%s1] sm:$0xff]
    %v15 = vld [vmem:[%s1 + $0x8] sm:$0x3]
    %v16 = vld [vmem:[%s1 + $0x10] sm:$0xff]
    %v17 = vld [vmem:[%s1 + $0x18] sm:$0x7f]
    %v18 = vld [vmem:[%s1 + $0x20] sm:$0xff]
    %v19 = vld [vmem:[%s1 + $0x28] sm:$0x3]
    %v20 = vld [vmem:[%s1 + $0x30] sm:$0xff]
    %v21 = vld [vmem:[%s1 + $0x38] sm:$0x7f]
    %v22 = vld [vmem:[%s1 + $0x40] sm:$0xff]
    %v23 = vld [vmem:[%s1 + $0x48] sm:$0x7f]
    %v24 = vld [vmem:[%s1 + $0x50] sm:$0x1]
    %vm25 = vcmask 80896
    %v27 = vsel %vm25, %v12, 0
    %v30 = vsel %vm25, %v13, 0
    %vm32 = vcmask 1041408
    %v34 = vsel %vm32, %v15, 0
    %36 = vmatprep.subr.mxu0 0.0
    %37 = vmatpush1.msra.mxu0 %v14
    %38 = vmatprep.subr.mxu0 0.0
    %39 = vmatpush1.msra.mxu0 %v34
    %40 = vmatprep.subr.mxu0 0.0
    %41 = vmatpush1.msra.mxu0 0.0
    %42 = vmatprep.subr.mxu0 0.0
    %43 = vmatpush1.msra.mxu0 0.0
    %44 = vmatprep.subr.mxu0 0.0
    %45 = vmatpush1.msra.mxu0 0.0
    %46 = vmatprep.subr.mxu0 0.0
    %47 = vmatpush1.msra.mxu0 0.0
    %48 = vmatprep.subr.mxu0 0.0
    %49 = vmatpush1.msra.mxu0 0.0
    %50 = vmatprep.subr.mxu0 0.0
    %51 = vmatpush1.msra.mxu0 0.0
    %52 = vmatprep.subr.mxu0 0.0
    %53 = vmatpush1.msra.mxu0 0.0
    %54 = vmatprep.subr.mxu0 0.0
    %55 = vmatpush1.msra.mxu0 0.0
    %56 = vmatprep.subr.mxu0 0.0
    %57 = vmatpush1.msra.mxu0 0.0
    %58 = vmatprep.subr.mxu0 0.0
    %59 = vmatpush1.msra.mxu0 0.0
    %60 = vmatprep.subr.mxu0 0.0
    %61 = vmatpush1.msra.mxu0 0.0
    %62 = vmatprep.subr.mxu0 0.0
    %63 = vmatpush1.msra.mxu0 0.0
    %64 = vmatprep.subr.mxu0 0.0
    %65 = vmatpush1.msra.mxu0 0.0
    %66 = vmatprep.subr.mxu0 0.0
    %67 = vmatpush1.msra.mxu0 0.0
    %68 = vmatprep.subr.mxu0 0.0
    %69 = vmatpush1.msra.mxu0 0.0
    %70 = vmatprep.subr.mxu0 0.0
    %71 = vmatpush1.msra.mxu0 0.0
    %72 = vmatprep.subr.mxu0 0.0
    %73 = vmatpush1.msra.mxu0 0.0
    %74 = vmatprep.subr.mxu0 0.0
    %75 = vmatpush1.msra.mxu0 0.0
    %76 = vmatprep.subr.mxu0 0.0
    %77 = vmatpush1.msra.mxu0 0.0
    %78 = vmatprep.subr.mxu0 0.0
    %79 = vmatpush1.msra.mxu0 0.0
    %80 = vmatprep.subr.mxu0 0.0
    %81 = vmatpush1.msra.mxu0 0.0
    %82 = vmatprep.subr.mxu0 0.0
    %83 = vmatpush1.msra.mxu0 0.0
    %84 = vmatprep.subr.mxu0 0.0
    %85 = vmatpush1.msra.mxu0 0.0
    %86 = vmatprep.subr.mxu0 0.0
    %87 = vmatpush1.msra.mxu0 0.0
    %88 = vmatprep.subr.mxu0 0.0
    %89 = vmatpush1.msra.mxu0 0.0
    %90 = vmatprep.subr.mxu0 0.0
    %91 = vmatpush1.msra.mxu0 0.0
    %92 = vmatprep.subr.mxu0 0.0
    %93 = vmatpush1.msra.mxu0 0.0
    %94 = vmatprep.subr.mxu0 0.0
    %95 = vmatpush1.msra.mxu0 0.0
    %96 = vmatprep.subr.mxu0 0.0
    %97 = vmatpush1.msra.mxu0 0.0
    %98 = vmatprep.subr.mxu0 0.0
    %99 = vmatpush1.msra.mxu0 0.0
    %100 = vmatprep.mubr.f32.mxu0 0.0
    %101 = vmatmul.mubr.f32.gmra.mrb[0].mxu0 %v27
    %v102 = vpop.f32.mrb[0].mxu0
    %v103 = vadd.f32 0.0, %v102
    %v104 = vpop.f32.mrb[0].mxu0
    %105 = vmatprep.mubr.f32.mxu0 0.0
    %106 = vmatmul.mubr.f32.gmra.mrb[0].mxu0 %v30
    %v107 = vpop.f32.mrb[0].mxu0
    %v108 = vadd.f32 0.0, %v107
    %v109 = vpop.f32.mrb[0].mxu0
    %110 = vdwg.mxu0
    %v112 = vsel %vm25, %v22, 0
    %v115 = vsel %vm25, %v23, 0
    %v118 = vsel %vm32, %v19, 0
    %120 = vmatprep.subr.mxu0 0.0
    %121 = vmatpush1.msra.mxu0 %v18
    %122 = vmatprep.subr.mxu0 0.0
    %123 = vmatpush1.msra.mxu0 %v118
    %124 = vmatprep.subr.mxu0 0.0
    %125 = vmatpush1.msra.mxu0 0.0
    %126 = vmatprep.subr.mxu0 0.0
    %127 = vmatpush1.msra.mxu0 0.0
    %128 = vmatprep.subr.mxu0 0.0
    %129 = vmatpush1.msra.mxu0 0.0
    %130 = vmatprep.subr.mxu0 0.0
    %131 = vmatpush1.msra.mxu0 0.0
    %132 = vmatprep.subr.mxu0 0.0
    %133 = vmatpush1.msra.mxu0 0.0
    %134 = vmatprep.subr.mxu0 0.0
    %135 = vmatpush1.msra.mxu0 0.0
    %136 = vmatprep.subr.mxu0 0.0
    %137 = vmatpush1.msra.mxu0 0.0
    %138 = vmatprep.subr.mxu0 0.0
    %139 = vmatpush1.msra.mxu0 0.0
    %140 = vmatprep.subr.mxu0 0.0
    %141 = vmatpush1.msra.mxu0 0.0
    %142 = vmatprep.subr.mxu0 0.0
    %143 = vmatpush1.msra.mxu0 0.0
    %144 = vmatprep.subr.mxu0 0.0
    %145 = vmatpush1.msra.mxu0 0.0
    %146 = vmatprep.subr.mxu0 0.0
    %147 = vmatpush1.msra.mxu0 0.0
    %148 = vmatprep.subr.mxu0 0.0
    %149 = vmatpush1.msra.mxu0 0.0
    %150 = vmatprep.subr.mxu0 0.0
    %151 = vmatpush1.msra.mxu0 0.0
    %152 = vmatprep.subr.mxu0 0.0
    %153 = vmatpush1.msra.mxu0 0.0
    %154 = vmatprep.subr.mxu0 0.0
    %155 = vmatpush1.msra.mxu0 0.0
    %156 = vmatprep.subr.mxu0 0.0
    %157 = vmatpush1.msra.mxu0 0.0
    %158 = vmatprep.subr.mxu0 0.0
    %159 = vmatpush1.msra.mxu0 0.0
    %160 = vmatprep.subr.mxu0 0.0
    %161 = vmatpush1.msra.mxu0 0.0
    %162 = vmatprep.subr.mxu0 0.0
    %163 = vmatpush1.msra.mxu0 0.0
    %164 = vmatprep.subr.mxu0 0.0
    %165 = vmatpush1.msra.mxu0 0.0
    %166 = vmatprep.subr.mxu0 0.0
    %167 = vmatpush1.msra.mxu0 0.0
    %168 = vmatprep.subr.mxu0 0.0
    %169 = vmatpush1.msra.mxu0 0.0
    %170 = vmatprep.subr.mxu0 0.0
    %171 = vmatpush1.msra.mxu0 0.0
    %172 = vmatprep.subr.mxu0 0.0
    %173 = vmatpush1.msra.mxu0 0.0
    %174 = vmatprep.subr.mxu0 0.0
    %175 = vmatpush1.msra.mxu0 0.0
    %176 = vmatprep.subr.mxu0 0.0
    %177 = vmatpush1.msra.mxu0 0.0
    %178 = vmatprep.subr.mxu0 0.0
    %179 = vmatpush1.msra.mxu0 0.0
    %180 = vmatprep.subr.mxu0 0.0
    %181 = vmatpush1.msra.mxu0 0.0
    %182 = vmatprep.subr.mxu0 0.0
    %183 = vmatpush1.msra.mxu0 0.0
    %184 = vmatprep.mubr.f32.mxu0 0.0
    %185 = vmatmul.mubr.f32.gmra.mrb[0].mxu0 %v112
    %v186 = vpop.f32.mrb[0].mxu0
    %v187 = vadd.f32 0.0, %v186
    %v188 = vpop.f32.mrb[0].mxu0
    %189 = vmatprep.mubr.f32.mxu0 0.0
    %190 = vmatmul.mubr.f32.gmra.mrb[0].mxu0 %v115
    %v191 = vpop.f32.mrb[0].mxu0
    %v192 = vadd.f32 0.0, %v191
    %v193 = vpop.f32.mrb[0].mxu0
    %194 = vdwg.mxu0
    %v195 = vadd.f32 %v20, %v187
    %v196 = vadd.f32 %v21, %v192
    %vm197 = vcmask 121856
    %v199 = vsel %vm197, 0.0, 0
    %vm201 = vcmask 1046528
    %v203 = vsel %vm201, %v17, 0
    %205 = vmatprep.subr.mxu0 0.0
    %206 = vmatpush1.msra.mxu0 %v16
    %207 = vmatprep.subr.mxu0 0.0
    %208 = vmatpush1.msra.mxu0 %v203
    %209 = vmatprep.subr.mxu0 0.0
    %210 = vmatpush1.msra.mxu0 0.0
    %211 = vmatprep.subr.mxu0 0.0
    %212 = vmatpush1.msra.mxu0 0.0
    %213 = vmatprep.subr.mxu0 0.0
    %214 = vmatpush1.msra.mxu0 0.0
    %215 = vmatprep.subr.mxu0 0.0
    %216 = vmatpush1.msra.mxu0 0.0
    %217 = vmatprep.subr.mxu0 0.0
    %218 = vmatpush1.msra.mxu0 0.0
    %219 = vmatprep.subr.mxu0 0.0
    %220 = vmatpush1.msra.mxu0 0.0
    %221 = vmatprep.subr.mxu0 0.0
    %222 = vmatpush1.msra.mxu0 0.0
    %223 = vmatprep.subr.mxu0 0.0
    %224 = vmatpush1.msra.mxu0 0.0
    %225 = vmatprep.subr.mxu0 0.0
    %226 = vmatpush1.msra.mxu0 0.0
    %227 = vmatprep.subr.mxu0 0.0
    %228 = vmatpush1.msra.mxu0 0.0
    %229 = vmatprep.subr.mxu0 0.0
    %230 = vmatpush1.msra.mxu0 0.0
    %231 = vmatprep.subr.mxu0 0.0
    %232 = vmatpush1.msra.mxu0 0.0
    %233 = vmatprep.subr.mxu0 0.0
    %234 = vmatpush1.msra.mxu0 0.0
    %235 = vmatprep.subr.mxu0 0.0
    %236 = vmatpush1.msra.mxu0 0.0
    %237 = vmatprep.subr.mxu0 0.0
    %238 = vmatpush1.msra.mxu0 0.0
    %239 = vmatprep.subr.mxu0 0.0
    %240 = vmatpush1.msra.mxu0 0.0
    %241 = vmatprep.subr.mxu0 0.0
    %242 = vmatpush1.msra.mxu0 0.0
    %243 = vmatprep.subr.mxu0 0.0
    %244 = vmatpush1.msra.mxu0 0.0
    %245 = vmatprep.subr.mxu0 0.0
    %246 = vmatpush1.msra.mxu0 0.0
    %247 = vmatprep.subr.mxu0 0.0
    %248 = vmatpush1.msra.mxu0 0.0
    %249 = vmatprep.subr.mxu0 0.0
    %250 = vmatpush1.msra.mxu0 0.0
    %251 = vmatprep.subr.mxu0 0.0
    %252 = vmatpush1.msra.mxu0 0.0
    %253 = vmatprep.subr.mxu0 0.0
    %254 = vmatpush1.msra.mxu0 0.0
    %255 = vmatprep.subr.mxu0 0.0
    %256 = vmatpush1.msra.mxu0 0.0
    %257 = vmatprep.subr.mxu0 0.0
    %258 = vmatpush1.msra.mxu0 0.0
    %259 = vmatprep.subr.mxu0 0.0
    %260 = vmatpush1.msra.mxu0 0.0
    %261 = vmatprep.subr.mxu0 0.0
    %262 = vmatpush1.msra.mxu0 0.0
    %263 = vmatprep.subr.mxu0 0.0
    %264 = vmatpush1.msra.mxu0 0.0
    %265 = vmatprep.subr.mxu0 0.0
    %266 = vmatpush1.msra.mxu0 0.0
    %267 = vmatprep.subr.mxu0 0.0
    %268 = vmatpush1.msra.mxu0 0.0
    %269 = vmatprep.mubr.f32.mxu0 0.0
    %270 = vmatmul.mubr.f32.gmra.mrb[0].mxu0 %v199
    %v271 = vpop.f32.mrb[0].mxu0
    %v272 = vadd.f32 0.0, %v271
    %v273 = vpop.f32.mrb[0].mxu0
    %274 = vdwg.mxu0
    %v275 = vadd.f32 %v103, %v272
    %v276 = vxor.u32 %v275, 2147483648
    %v277 = vmul.f32 %v276, 1.442695
    %v278 = vpow.pop %v277
    %v279 = vadd.f32 %v278, 1.0
    %v280 = vrcp.pop %v279
    %v281 = vmul.f32 1.0, %v280
    %v283 = vsel %vm197, %v281, 0
    %285 = vmatprep.subr.mxu0 0.0
    %286 = vmatpush1.msra.mxu0 %v16
    %287 = vmatprep.subr.mxu0 0.0
    %288 = vmatpush1.msra.mxu0 %v203
    %289 = vmatprep.subr.mxu0 0.0
    %290 = vmatpush1.msra.mxu0 0.0
    %291 = vmatprep.subr.mxu0 0.0
    %292 = vmatpush1.msra.mxu0 0.0
    %293 = vmatprep.subr.mxu0 0.0
    %294 = vmatpush1.msra.mxu0 0.0
    %295 = vmatprep.subr.mxu0 0.0
    %296 = vmatpush1.msra.mxu0 0.0
    %297 = vmatprep.subr.mxu0 0.0
    %298 = vmatpush1.msra.mxu0 0.0
    %299 = vmatprep.subr.mxu0 0.0
    %300 = vmatpush1.msra.mxu0 0.0
    %301 = vmatprep.subr.mxu0 0.0
    %302 = vmatpush1.msra.mxu0 0.0
    %303 = vmatprep.subr.mxu0 0.0
    %304 = vmatpush1.msra.mxu0 0.0
    %305 = vmatprep.subr.mxu0 0.0
    %306 = vmatpush1.msra.mxu0 0.0
    %307 = vmatprep.subr.mxu0 0.0
    %308 = vmatpush1.msra.mxu0 0.0
    %309 = vmatprep.subr.mxu0 0.0
    %310 = vmatpush1.msra.mxu0 0.0
    %311 = vmatprep.subr.mxu0 0.0
    %312 = vmatpush1.msra.mxu0 0.0
    %313 = vmatprep.subr.mxu0 0.0
    %314 = vmatpush1.msra.mxu0 0.0
    %315 = vmatprep.subr.mxu0 0.0
    %316 = vmatpush1.msra.mxu0 0.0
    %317 = vmatprep.subr.mxu0 0.0
    %318 = vmatpush1.msra.mxu0 0.0
    %319 = vmatprep.subr.mxu0 0.0
    %320 = vmatpush1.msra.mxu0 0.0
    %321 = vmatprep.subr.mxu0 0.0
    %322 = vmatpush1.msra.mxu0 0.0
    %323 = vmatprep.subr.mxu0 0.0
    %324 = vmatpush1.msra.mxu0 0.0
    %325 = vmatprep.subr.mxu0 0.0
    %326 = vmatpush1.msra.mxu0 0.0
    %327 = vmatprep.subr.mxu0 0.0
    %328 = vmatpush1.msra.mxu0 0.0
    %329 = vmatprep.subr.mxu0 0.0
    %330 = vmatpush1.msra.mxu0 0.0
    %331 = vmatprep.subr.mxu0 0.0
    %332 = vmatpush1.msra.mxu0 0.0
    %333 = vmatprep.subr.mxu0 0.0
    %334 = vmatpush1.msra.mxu0 0.0
    %335 = vmatprep.subr.mxu0 0.0
    %336 = vmatpush1.msra.mxu0 0.0
    %337 = vmatprep.subr.mxu0 0.0
    %338 = vmatpush1.msra.mxu0 0.0
    %339 = vmatprep.subr.mxu0 0.0
    %340 = vmatpush1.msra.mxu0 0.0
    %341 = vmatprep.subr.mxu0 0.0
    %342 = vmatpush1.msra.mxu0 0.0
    %343 = vmatprep.subr.mxu0 0.0
    %344 = vmatpush1.msra.mxu0 0.0
    %345 = vmatprep.subr.mxu0 0.0
    %346 = vmatpush1.msra.mxu0 0.0
    %347 = vmatprep.subr.mxu0 0.0
    %348 = vmatpush1.msra.mxu0 0.0
    %349 = vmatprep.mubr.f32.mxu0 0.0
    %350 = vmatmul.mubr.f32.gmra.mrb[0].mxu0 %v283
    %v351 = vpop.f32.mrb[0].mxu0
    %v352 = vadd.f32 0.0, %v351
    %v353 = vpop.f32.mrb[0].mxu0
    %354 = vdwg.mxu0
    %v356 = vrot.slane %v352, 7
    %v358 = vadd.f32 %v103, %v356
    %v359 = vxor.u32 %v358, 2147483648
    %v360 = vmul.f32 %v359, 1.442695
    %v361 = vpow.pop %v360
    %v362 = vadd.f32 %v361, 1.0
    %v363 = vrcp.pop %v362
    %v364 = vmul.f32 1.0, %v363
    %v366 = vrot.slane %v364, 1
    %v367 = vsel %vm197, %v366, 0
    %369 = vmatprep.subr.mxu0 0.0
    %370 = vmatpush1.msra.mxu0 %v16
    %371 = vmatprep.subr.mxu0 0.0
    %372 = vmatpush1.msra.mxu0 %v203
    %373 = vmatprep.subr.mxu0 0.0
    %374 = vmatpush1.msra.mxu0 0.0
    %375 = vmatprep.subr.mxu0 0.0
    %376 = vmatpush1.msra.mxu0 0.0
    %377 = vmatprep.subr.mxu0 0.0
    %378 = vmatpush1.msra.mxu0 0.0
    %379 = vmatprep.subr.mxu0 0.0
    %380 = vmatpush1.msra.mxu0 0.0
    %381 = vmatprep.subr.mxu0 0.0
    %382 = vmatpush1.msra.mxu0 0.0
    %383 = vmatprep.subr.mxu0 0.0
    %384 = vmatpush1.msra.mxu0 0.0
    %385 = vmatprep.subr.mxu0 0.0
    %386 = vmatpush1.msra.mxu0 0.0
    %387 = vmatprep.subr.mxu0 0.0
    %388 = vmatpush1.msra.mxu0 0.0
    %389 = vmatprep.subr.mxu0 0.0
    %390 = vmatpush1.msra.mxu0 0.0
    %391 = vmatprep.subr.mxu0 0.0
    %392 = vmatpush1.msra.mxu0 0.0
    %393 = vmatprep.subr.mxu0 0.0
    %394 = vmatpush1.msra.mxu0 0.0
    %395 = vmatprep.subr.mxu0 0.0
    %396 = vmatpush1.msra.mxu0 0.0
    %397 = vmatprep.subr.mxu0 0.0
    %398 = vmatpush1.msra.mxu0 0.0
    %399 = vmatprep.subr.mxu0 0.0
    %400 = vmatpush1.msra.mxu0 0.0
    %401 = vmatprep.subr.mxu0 0.0
    %402 = vmatpush1.msra.mxu0 0.0
    %403 = vmatprep.subr.mxu0 0.0
    %404 = vmatpush1.msra.mxu0 0.0
    %405 = vmatprep.subr.mxu0 0.0
    %406 = vmatpush1.msra.mxu0 0.0
    %407 = vmatprep.subr.mxu0 0.0
    %408 = vmatpush1.msra.mxu0 0.0
    %409 = vmatprep.subr.mxu0 0.0
    %410 = vmatpush1.msra.mxu0 0.0
    %411 = vmatprep.subr.mxu0 0.0
    %412 = vmatpush1.msra.mxu0 0.0
    %413 = vmatprep.subr.mxu0 0.0
    %414 = vmatpush1.msra.mxu0 0.0
    %415 = vmatprep.subr.mxu0 0.0
    %416 = vmatpush1.msra.mxu0 0.0
    %417 = vmatprep.subr.mxu0 0.0
    %418 = vmatpush1.msra.mxu0 0.0
    %419 = vmatprep.subr.mxu0 0.0
    %420 = vmatpush1.msra.mxu0 0.0
    %421 = vmatprep.subr.mxu0 0.0
    %422 = vmatpush1.msra.mxu0 0.0
    %423 = vmatprep.subr.mxu0 0.0
    %424 = vmatpush1.msra.mxu0 0.0
    %425 = vmatprep.subr.mxu0 0.0
    %426 = vmatpush1.msra.mxu0 0.0
    %427 = vmatprep.subr.mxu0 0.0
    %428 = vmatpush1.msra.mxu0 0.0
    %429 = vmatprep.subr.mxu0 0.0
    %430 = vmatpush1.msra.mxu0 0.0
    %431 = vmatprep.subr.mxu0 0.0
    %432 = vmatpush1.msra.mxu0 0.0
    %433 = vmatprep.mubr.f32.mxu0 0.0
    %434 = vmatmul.mubr.f32.gmra.mrb[0].mxu0 %v367
    %v435 = vpop.f32.mrb[0].mxu0
    %v436 = vadd.f32 0.0, %v435
    %v437 = vpop.f32.mrb[0].mxu0
    %438 = vdwg.mxu0
    %v440 = vrot.slane %v436, 6
    %v442 = vadd.f32 %v103, %v440
    %v443 = vxor.u32 %v442, 2147483648
    %v444 = vmul.f32 %v443, 1.442695
    %v445 = vpow.pop %v444
    %v446 = vadd.f32 %v445, 1.0
    %v447 = vrcp.pop %v446
    %v448 = vmul.f32 1.0, %v447
    %v450 = vrot.slane %v448, 2
    %v451 = vsel %vm197, %v450, 0
    %453 = vmatprep.subr.mxu0 0.0
    %454 = vmatpush1.msra.mxu0 %v16
    %455 = vmatprep.subr.mxu0 0.0
    %456 = vmatpush1.msra.mxu0 %v203
    %457 = vmatprep.subr.mxu0 0.0
    %458 = vmatpush1.msra.mxu0 0.0
    %459 = vmatprep.subr.mxu0 0.0
    %460 = vmatpush1.msra.mxu0 0.0
    %461 = vmatprep.subr.mxu0 0.0
    %462 = vmatpush1.msra.mxu0 0.0
    %463 = vmatprep.subr.mxu0 0.0
    %464 = vmatpush1.msra.mxu0 0.0
    %465 = vmatprep.subr.mxu0 0.0
    %466 = vmatpush1.msra.mxu0 0.0
    %467 = vmatprep.subr.mxu0 0.0
    %468 = vmatpush1.msra.mxu0 0.0
    %469 = vmatprep.subr.mxu0 0.0
    %470 = vmatpush1.msra.mxu0 0.0
    %471 = vmatprep.subr.mxu0 0.0
    %472 = vmatpush1.msra.mxu0 0.0
    %473 = vmatprep.subr.mxu0 0.0
    %474 = vmatpush1.msra.mxu0 0.0
    %475 = vmatprep.subr.mxu0 0.0
    %476 = vmatpush1.msra.mxu0 0.0
    %477 = vmatprep.subr.mxu0 0.0
    %478 = vmatpush1.msra.mxu0 0.0
    %479 = vmatprep.subr.mxu0 0.0
    %480 = vmatpush1.msra.mxu0 0.0
    %481 = vmatprep.subr.mxu0 0.0
    %482 = vmatpush1.msra.mxu0 0.0
    %483 = vmatprep.subr.mxu0 0.0
    %484 = vmatpush1.msra.mxu0 0.0
    %485 = vmatprep.subr.mxu0 0.0
    %486 = vmatpush1.msra.mxu0 0.0
    %487 = vmatprep.subr.mxu0 0.0
    %488 = vmatpush1.msra.mxu0 0.0
    %489 = vmatprep.subr.mxu0 0.0
    %490 = vmatpush1.msra.mxu0 0.0
    %491 = vmatprep.subr.mxu0 0.0
    %492 = vmatpush1.msra.mxu0 0.0
    %493 = vmatprep.subr.mxu0 0.0
    %494 = vmatpush1.msra.mxu0 0.0
    %495 = vmatprep.subr.mxu0 0.0
    %496 = vmatpush1.msra.mxu0 0.0
    %497 = vmatprep.subr.mxu0 0.0
    %498 = vmatpush1.msra.mxu0 0.0
    %499 = vmatprep.subr.mxu0 0.0
    %500 = vmatpush1.msra.mxu0 0.0
    %501 = vmatprep.subr.mxu0 0.0
    %502 = vmatpush1.msra.mxu0 0.0
    %503 = vmatprep.subr.mxu0 0.0
    %504 = vmatpush1.msra.mxu0 0.0
    %505 = vmatprep.subr.mxu0 0.0
    %506 = vmatpush1.msra.mxu0 0.0
    %507 = vmatprep.subr.mxu0 0.0
    %508 = vmatpush1.msra.mxu0 0.0
    %509 = vmatprep.subr.mxu0 0.0
    %510 = vmatpush1.msra.mxu0 0.0
    %511 = vmatprep.subr.mxu0 0.0
    %512 = vmatpush1.msra.mxu0 0.0
    %513 = vmatprep.subr.mxu0 0.0
    %514 = vmatpush1.msra.mxu0 0.0
    %515 = vmatprep.subr.mxu0 0.0
    %516 = vmatpush1.msra.mxu0 0.0
    %517 = vmatprep.mubr.f32.mxu0 0.0
    %518 = vmatmul.mubr.f32.gmra.mrb[0].mxu0 %v451
    %v519 = vpop.f32.mrb[0].mxu0
    %v520 = vadd.f32 0.0, %v519
    %v521 = vpop.f32.mrb[0].mxu0
    %522 = vdwg.mxu0
    %v524 = vrot.slane %v520, 5
    %v526 = vadd.f32 %v103, %v524
    %v527 = vxor.u32 %v526, 2147483648
    %v528 = vmul.f32 %v527, 1.442695
    %v529 = vpow.pop %v528
    %v530 = vadd.f32 %v529, 1.0
    %v531 = vrcp.pop %v530
    %v532 = vmul.f32 1.0, %v531
    %v534 = vrot.slane %v532, 3
    %v535 = vsel %vm197, %v534, 0
    %537 = vmatprep.subr.mxu0 0.0
    %538 = vmatpush1.msra.mxu0 %v16
    %539 = vmatprep.subr.mxu0 0.0
    %540 = vmatpush1.msra.mxu0 %v203
    %541 = vmatprep.subr.mxu0 0.0
    %542 = vmatpush1.msra.mxu0 0.0
    %543 = vmatprep.subr.mxu0 0.0
    %544 = vmatpush1.msra.mxu0 0.0
    %545 = vmatprep.subr.mxu0 0.0
    %546 = vmatpush1.msra.mxu0 0.0
    %547 = vmatprep.subr.mxu0 0.0
    %548 = vmatpush1.msra.mxu0 0.0
    %549 = vmatprep.subr.mxu0 0.0
    %550 = vmatpush1.msra.mxu0 0.0
    %551 = vmatprep.subr.mxu0 0.0
    %552 = vmatpush1.msra.mxu0 0.0
    %553 = vmatprep.subr.mxu0 0.0
    %554 = vmatpush1.msra.mxu0 0.0
    %555 = vmatprep.subr.mxu0 0.0
    %556 = vmatpush1.msra.mxu0 0.0
    %557 = vmatprep.subr.mxu0 0.0
    %558 = vmatpush1.msra.mxu0 0.0
    %559 = vmatprep.subr.mxu0 0.0
    %560 = vmatpush1.msra.mxu0 0.0
    %561 = vmatprep.subr.mxu0 0.0
    %562 = vmatpush1.msra.mxu0 0.0
    %563 = vmatprep.subr.mxu0 0.0
    %564 = vmatpush1.msra.mxu0 0.0
    %565 = vmatprep.subr.mxu0 0.0
    %566 = vmatpush1.msra.mxu0 0.0
    %567 = vmatprep.subr.mxu0 0.0
    %568 = vmatpush1.msra.mxu0 0.0
    %569 = vmatprep.subr.mxu0 0.0
    %570 = vmatpush1.msra.mxu0 0.0
    %571 = vmatprep.subr.mxu0 0.0
    %572 = vmatpush1.msra.mxu0 0.0
    %573 = vmatprep.subr.mxu0 0.0
    %574 = vmatpush1.msra.mxu0 0.0
    %575 = vmatprep.subr.mxu0 0.0
    %576 = vmatpush1.msra.mxu0 0.0
    %577 = vmatprep.subr.mxu0 0.0
    %578 = vmatpush1.msra.mxu0 0.0
    %579 = vmatprep.subr.mxu0 0.0
    %580 = vmatpush1.msra.mxu0 0.0
    %581 = vmatprep.subr.mxu0 0.0
    %582 = vmatpush1.msra.mxu0 0.0
    %583 = vmatprep.subr.mxu0 0.0
    %584 = vmatpush1.msra.mxu0 0.0
    %585 = vmatprep.subr.mxu0 0.0
    %586 = vmatpush1.msra.mxu0 0.0
    %587 = vmatprep.subr.mxu0 0.0
    %588 = vmatpush1.msra.mxu0 0.0
    %589 = vmatprep.subr.mxu0 0.0
    %590 = vmatpush1.msra.mxu0 0.0
    %591 = vmatprep.subr.mxu0 0.0
    %592 = vmatpush1.msra.mxu0 0.0
    %593 = vmatprep.subr.mxu0 0.0
    %594 = vmatpush1.msra.mxu0 0.0
    %595 = vmatprep.subr.mxu0 0.0
    %596 = vmatpush1.msra.mxu0 0.0
    %597 = vmatprep.subr.mxu0 0.0
    %598 = vmatpush1.msra.mxu0 0.0
    %599 = vmatprep.subr.mxu0 0.0
    %600 = vmatpush1.msra.mxu0 0.0
    %601 = vmatprep.mubr.f32.mxu0 0.0
    %602 = vmatmul.mubr.f32.gmra.mrb[0].mxu0 %v535
    %v603 = vpop.f32.mrb[0].mxu0
    %v604 = vadd.f32 0.0, %v603
    %v605 = vpop.f32.mrb[0].mxu0
    %606 = vdwg.mxu0
    %v608 = vrot.slane %v604, 4
    %v610 = vadd.f32 %v103, %v608
    %v611 = vxor.u32 %v610, 2147483648
    %v612 = vmul.f32 %v611, 1.442695
    %v613 = vpow.pop %v612
    %v614 = vadd.f32 %v613, 1.0
    %v615 = vrcp.pop %v614
    %v616 = vmul.f32 1.0, %v615
    %v618 = vrot.slane %v616, 4
    %v619 = vsel %vm197, %v618, 0
    %621 = vmatprep.subr.mxu0 0.0
    %622 = vmatpush1.msra.mxu0 %v16
    %623 = vmatprep.subr.mxu0 0.0
    %624 = vmatpush1.msra.mxu0 %v203
    %625 = vmatprep.subr.mxu0 0.0
    %626 = vmatpush1.msra.mxu0 0.0
    %627 = vmatprep.subr.mxu0 0.0
    %628 = vmatpush1.msra.mxu0 0.0
    %629 = vmatprep.subr.mxu0 0.0
    %630 = vmatpush1.msra.mxu0 0.0
    %631 = vmatprep.subr.mxu0 0.0
    %632 = vmatpush1.msra.mxu0 0.0
    %633 = vmatprep.subr.mxu0 0.0
    %634 = vmatpush1.msra.mxu0 0.0
    %635 = vmatprep.subr.mxu0 0.0
    %636 = vmatpush1.msra.mxu0 0.0
    %637 = vmatprep.subr.mxu0 0.0
    %638 = vmatpush1.msra.mxu0 0.0
    %639 = vmatprep.subr.mxu0 0.0
    %640 = vmatpush1.msra.mxu0 0.0
    %641 = vmatprep.subr.mxu0 0.0
    %642 = vmatpush1.msra.mxu0 0.0
    %643 = vmatprep.subr.mxu0 0.0
    %644 = vmatpush1.msra.mxu0 0.0
    %645 = vmatprep.subr.mxu0 0.0
    %646 = vmatpush1.msra.mxu0 0.0
    %647 = vmatprep.subr.mxu0 0.0
    %648 = vmatpush1.msra.mxu0 0.0
    %649 = vmatprep.subr.mxu0 0.0
    %650 = vmatpush1.msra.mxu0 0.0
    %651 = vmatprep.subr.mxu0 0.0
    %652 = vmatpush1.msra.mxu0 0.0
    %653 = vmatprep.subr.mxu0 0.0
    %654 = vmatpush1.msra.mxu0 0.0
    %655 = vmatprep.subr.mxu0 0.0
    %656 = vmatpush1.msra.mxu0 0.0
    %657 = vmatprep.subr.mxu0 0.0
    %658 = vmatpush1.msra.mxu0 0.0
    %659 = vmatprep.subr.mxu0 0.0
    %660 = vmatpush1.msra.mxu0 0.0
    %661 = vmatprep.subr.mxu0 0.0
    %662 = vmatpush1.msra.mxu0 0.0
    %663 = vmatprep.subr.mxu0 0.0
    %664 = vmatpush1.msra.mxu0 0.0
    %665 = vmatprep.subr.mxu0 0.0
    %666 = vmatpush1.msra.mxu0 0.0
    %667 = vmatprep.subr.mxu0 0.0
    %668 = vmatpush1.msra.mxu0 0.0
    %669 = vmatprep.subr.mxu0 0.0
    %670 = vmatpush1.msra.mxu0 0.0
    %671 = vmatprep.subr.mxu0 0.0
    %672 = vmatpush1.msra.mxu0 0.0
    %673 = vmatprep.subr.mxu0 0.0
    %674 = vmatpush1.msra.mxu0 0.0
    %675 = vmatprep.subr.mxu0 0.0
    %676 = vmatpush1.msra.mxu0 0.0
    %677 = vmatprep.subr.mxu0 0.0
    %678 = vmatpush1.msra.mxu0 0.0
    %679 = vmatprep.subr.mxu0 0.0
    %680 = vmatpush1.msra.mxu0 0.0
    %681 = vmatprep.subr.mxu0 0.0
    %682 = vmatpush1.msra.mxu0 0.0
    %683 = vmatprep.subr.mxu0 0.0
    %684 = vmatpush1.msra.mxu0 0.0
    %685 = vmatprep.mubr.f32.mxu0 0.0
    %686 = vmatmul.mubr.f32.gmra.mrb[0].mxu0 %v619
    %v687 = vpop.f32.mrb[0].mxu0
    %v688 = vadd.f32 0.0, %v687
    %v689 = vpop.f32.mrb[0].mxu0
    %690 = vdwg.mxu0
    %v692 = vrot.slane %v688, 3
    %v694 = vadd.f32 %v103, %v692
    %v695 = vxor.u32 %v694, 2147483648
    %v696 = vmul.f32 %v695, 1.442695
    %v697 = vpow.pop %v696
    %v698 = vadd.f32 %v697, 1.0
    %v699 = vrcp.pop %v698
    %v700 = vmul.f32 1.0, %v699
    %v702 = vrot.slane %v700, 5
    %v703 = vsel %vm197, %v702, 0
    %705 = vmatprep.subr.mxu0 0.0
    %706 = vmatpush1.msra.mxu0 %v16
    %707 = vmatprep.subr.mxu0 0.0
    %708 = vmatpush1.msra.mxu0 %v203
    %709 = vmatprep.subr.mxu0 0.0
    %710 = vmatpush1.msra.mxu0 0.0
    %711 = vmatprep.subr.mxu0 0.0
    %712 = vmatpush1.msra.mxu0 0.0
    %713 = vmatprep.subr.mxu0 0.0
    %714 = vmatpush1.msra.mxu0 0.0
    %715 = vmatprep.subr.mxu0 0.0
    %716 = vmatpush1.msra.mxu0 0.0
    %717 = vmatprep.subr.mxu0 0.0
    %718 = vmatpush1.msra.mxu0 0.0
    %719 = vmatprep.subr.mxu0 0.0
    %720 = vmatpush1.msra.mxu0 0.0
    %721 = vmatprep.subr.mxu0 0.0
    %722 = vmatpush1.msra.mxu0 0.0
    %723 = vmatprep.subr.mxu0 0.0
    %724 = vmatpush1.msra.mxu0 0.0
    %725 = vmatprep.subr.mxu0 0.0
    %726 = vmatpush1.msra.mxu0 0.0
    %727 = vmatprep.subr.mxu0 0.0
    %728 = vmatpush1.msra.mxu0 0.0
    %729 = vmatprep.subr.mxu0 0.0
    %730 = vmatpush1.msra.mxu0 0.0
    %731 = vmatprep.subr.mxu0 0.0
    %732 = vmatpush1.msra.mxu0 0.0
    %733 = vmatprep.subr.mxu0 0.0
    %734 = vmatpush1.msra.mxu0 0.0
    %735 = vmatprep.subr.mxu0 0.0
    %736 = vmatpush1.msra.mxu0 0.0
    %737 = vmatprep.subr.mxu0 0.0
    %738 = vmatpush1.msra.mxu0 0.0
    %739 = vmatprep.subr.mxu0 0.0
    %740 = vmatpush1.msra.mxu0 0.0
    %741 = vmatprep.subr.mxu0 0.0
    %742 = vmatpush1.msra.mxu0 0.0
    %743 = vmatprep.subr.mxu0 0.0
    %744 = vmatpush1.msra.mxu0 0.0
    %745 = vmatprep.subr.mxu0 0.0
    %746 = vmatpush1.msra.mxu0 0.0
    %747 = vmatprep.subr.mxu0 0.0
    %748 = vmatpush1.msra.mxu0 0.0
    %749 = vmatprep.subr.mxu0 0.0
    %750 = vmatpush1.msra.mxu0 0.0
    %751 = vmatprep.subr.mxu0 0.0
    %752 = vmatpush1.msra.mxu0 0.0
    %753 = vmatprep.subr.mxu0 0.0
    %754 = vmatpush1.msra.mxu0 0.0
    %755 = vmatprep.subr.mxu0 0.0
    %756 = vmatpush1.msra.mxu0 0.0
    %757 = vmatprep.subr.mxu0 0.0
    %758 = vmatpush1.msra.mxu0 0.0
    %759 = vmatprep.subr.mxu0 0.0
    %760 = vmatpush1.msra.mxu0 0.0
    %761 = vmatprep.subr.mxu0 0.0
    %762 = vmatpush1.msra.mxu0 0.0
    %763 = vmatprep.subr.mxu0 0.0
    %764 = vmatpush1.msra.mxu0 0.0
    %765 = vmatprep.subr.mxu0 0.0
    %766 = vmatpush1.msra.mxu0 0.0
    %767 = vmatprep.subr.mxu0 0.0
    %768 = vmatpush1.msra.mxu0 0.0
    %769 = vmatprep.mubr.f32.mxu0 0.0
    %770 = vmatmul.mubr.f32.gmra.mrb[0].mxu0 %v703
    %v771 = vpop.f32.mrb[0].mxu0
    %v772 = vadd.f32 0.0, %v771
    %v773 = vpop.f32.mrb[0].mxu0
    %774 = vdwg.mxu0
    %v776 = vrot.slane %v772, 2
    %v778 = vadd.f32 %v103, %v776
    %v779 = vxor.u32 %v778, 2147483648
    %v780 = vmul.f32 %v779, 1.442695
    %v781 = vpow.pop %v780
    %v782 = vadd.f32 %v781, 1.0
    %v783 = vrcp.pop %v782
    %v784 = vmul.f32 1.0, %v783
    %v786 = vrot.slane %v784, 6
    %v787 = vsel %vm197, %v786, 0
    %789 = vmatprep.subr.mxu0 0.0
    %790 = vmatpush1.msra.mxu0 %v16
    %791 = vmatprep.subr.mxu0 0.0
    %792 = vmatpush1.msra.mxu0 %v203
    %793 = vmatprep.subr.mxu0 0.0
    %794 = vmatpush1.msra.mxu0 0.0
    %795 = vmatprep.subr.mxu0 0.0
    %796 = vmatpush1.msra.mxu0 0.0
    %797 = vmatprep.subr.mxu0 0.0
    %798 = vmatpush1.msra.mxu0 0.0
    %799 = vmatprep.subr.mxu0 0.0
    %800 = vmatpush1.msra.mxu0 0.0
    %801 = vmatprep.subr.mxu0 0.0
    %802 = vmatpush1.msra.mxu0 0.0
    %803 = vmatprep.subr.mxu0 0.0
    %804 = vmatpush1.msra.mxu0 0.0
    %805 = vmatprep.subr.mxu0 0.0
    %806 = vmatpush1.msra.mxu0 0.0
    %807 = vmatprep.subr.mxu0 0.0
    %808 = vmatpush1.msra.mxu0 0.0
    %809 = vmatprep.subr.mxu0 0.0
    %810 = vmatpush1.msra.mxu0 0.0
    %811 = vmatprep.subr.mxu0 0.0
    %812 = vmatpush1.msra.mxu0 0.0
    %813 = vmatprep.subr.mxu0 0.0
    %814 = vmatpush1.msra.mxu0 0.0
    %815 = vmatprep.subr.mxu0 0.0
    %816 = vmatpush1.msra.mxu0 0.0
    %817 = vmatprep.subr.mxu0 0.0
    %818 = vmatpush1.msra.mxu0 0.0
    %819 = vmatprep.subr.mxu0 0.0
    %820 = vmatpush1.msra.mxu0 0.0
    %821 = vmatprep.subr.mxu0 0.0
    %822 = vmatpush1.msra.mxu0 0.0
    %823 = vmatprep.subr.mxu0 0.0
    %824 = vmatpush1.msra.mxu0 0.0
    %825 = vmatprep.subr.mxu0 0.0
    %826 = vmatpush1.msra.mxu0 0.0
    %827 = vmatprep.subr.mxu0 0.0
    %828 = vmatpush1.msra.mxu0 0.0
    %829 = vmatprep.subr.mxu0 0.0
    %830 = vmatpush1.msra.mxu0 0.0
    %831 = vmatprep.subr.mxu0 0.0
    %832 = vmatpush1.msra.mxu0 0.0
    %833 = vmatprep.subr.mxu0 0.0
    %834 = vmatpush1.msra.mxu0 0.0
    %835 = vmatprep.subr.mxu0 0.0
    %836 = vmatpush1.msra.mxu0 0.0
    %837 = vmatprep.subr.mxu0 0.0
    %838 = vmatpush1.msra.mxu0 0.0
    %839 = vmatprep.subr.mxu0 0.0
    %840 = vmatpush1.msra.mxu0 0.0
    %841 = vmatprep.subr.mxu0 0.0
    %842 = vmatpush1.msra.mxu0 0.0
    %843 = vmatprep.subr.mxu0 0.0
    %844 = vmatpush1.msra.mxu0 0.0
    %845 = vmatprep.subr.mxu0 0.0
    %846 = vmatpush1.msra.mxu0 0.0
    %847 = vmatprep.subr.mxu0 0.0
    %848 = vmatpush1.msra.mxu0 0.0
    %849 = vmatprep.subr.mxu0 0.0
    %850 = vmatpush1.msra.mxu0 0.0
    %851 = vmatprep.subr.mxu0 0.0
    %852 = vmatpush1.msra.mxu0 0.0
    %853 = vmatprep.mubr.f32.mxu0 0.0
    %854 = vmatmul.mubr.f32.gmra.mrb[0].mxu0 %v787
    %v855 = vpop.f32.mrb[0].mxu0
    %v856 = vadd.f32 0.0, %v855
    %v857 = vpop.f32.mrb[0].mxu0
    %858 = vdwg.mxu0
    %v860 = vrot.slane %v856, 1
    %v862 = vadd.f32 %v103, %v860
    %v863 = vxor.u32 %v862, 2147483648
    %v864 = vmul.f32 %v863, 1.442695
    %v865 = vpow.pop %v864
    %v866 = vadd.f32 %v865, 1.0
    %v867 = vrcp.pop %v866
    %v868 = vmul.f32 1.0, %v867
    %v870 = vrot.slane %v868, 7
    %v871 = vsel %vm197, %v870, 0
    %873 = vmatprep.subr.mxu0 0.0
    %874 = vmatpush1.msra.mxu0 %v16
    %875 = vmatprep.subr.mxu0 0.0
    %876 = vmatpush1.msra.mxu0 %v203
    %877 = vmatprep.subr.mxu0 0.0
    %878 = vmatpush1.msra.mxu0 0.0
    %879 = vmatprep.subr.mxu0 0.0
    %880 = vmatpush1.msra.mxu0 0.0
    %881 = vmatprep.subr.mxu0 0.0
    %882 = vmatpush1.msra.mxu0 0.0
    %883 = vmatprep.subr.mxu0 0.0
    %884 = vmatpush1.msra.mxu0 0.0
    %885 = vmatprep.subr.mxu0 0.0
    %886 = vmatpush1.msra.mxu0 0.0
    %887 = vmatprep.subr.mxu0 0.0
    %888 = vmatpush1.msra.mxu0 0.0
    %889 = vmatprep.subr.mxu0 0.0
    %890 = vmatpush1.msra.mxu0 0.0
    %891 = vmatprep.subr.mxu0 0.0
    %892 = vmatpush1.msra.mxu0 0.0
    %893 = vmatprep.subr.mxu0 0.0
    %894 = vmatpush1.msra.mxu0 0.0
    %895 = vmatprep.subr.mxu0 0.0
    %896 = vmatpush1.msra.mxu0 0.0
    %897 = vmatprep.subr.mxu0 0.0
    %898 = vmatpush1.msra.mxu0 0.0
    %899 = vmatprep.subr.mxu0 0.0
    %900 = vmatpush1.msra.mxu0 0.0
    %901 = vmatprep.subr.mxu0 0.0
    %902 = vmatpush1.msra.mxu0 0.0
    %903 = vmatprep.subr.mxu0 0.0
    %904 = vmatpush1.msra.mxu0 0.0
    %905 = vmatprep.subr.mxu0 0.0
    %906 = vmatpush1.msra.mxu0 0.0
    %907 = vmatprep.subr.mxu0 0.0
    %908 = vmatpush1.msra.mxu0 0.0
    %909 = vmatprep.subr.mxu0 0.0
    %910 = vmatpush1.msra.mxu0 0.0
    %911 = vmatprep.subr.mxu0 0.0
    %912 = vmatpush1.msra.mxu0 0.0
    %913 = vmatprep.subr.mxu0 0.0
    %914 = vmatpush1.msra.mxu0 0.0
    %915 = vmatprep.subr.mxu0 0.0
    %916 = vmatpush1.msra.mxu0 0.0
    %917 = vmatprep.subr.mxu0 0.0
    %918 = vmatpush1.msra.mxu0 0.0
    %919 = vmatprep.subr.mxu0 0.0
    %920 = vmatpush1.msra.mxu0 0.0
    %921 = vmatprep.subr.mxu0 0.0
    %922 = vmatpush1.msra.mxu0 0.0
    %923 = vmatprep.subr.mxu0 0.0
    %924 = vmatpush1.msra.mxu0 0.0
    %925 = vmatprep.subr.mxu0 0.0
    %926 = vmatpush1.msra.mxu0 0.0
    %927 = vmatprep.subr.mxu0 0.0
    %928 = vmatpush1.msra.mxu0 0.0
    %929 = vmatprep.subr.mxu0 0.0
    %930 = vmatpush1.msra.mxu0 0.0
    %931 = vmatprep.subr.mxu0 0.0
    %932 = vmatpush1.msra.mxu0 0.0
    %933 = vmatprep.subr.mxu0 0.0
    %934 = vmatpush1.msra.mxu0 0.0
    %935 = vmatprep.subr.mxu0 0.0
    %936 = vmatpush1.msra.mxu0 0.0
    %937 = vmatprep.mubr.f32.mxu0 0.0
    %938 = vmatmul.mubr.f32.gmra.mrb[0].mxu0 %v871
    %v939 = vpop.f32.mrb[0].mxu0
    %v940 = vadd.f32 0.0, %v939
    %v941 = vpop.f32.mrb[0].mxu0
    %942 = vdwg.mxu0
    %v943 = vadd.f32 %v108, %v940
    %v944 = vxor.u32 %v943, 2147483648
    %v945 = vmul.f32 %v944, 1.442695
    %v946 = vpow.pop %v945
    %v947 = vadd.f32 %v946, 1.0
    %v948 = vrcp.pop %v947
    %v949 = vmul.f32 1.0, %v948
    %v951 = vsel %vm197, %v949, 0
    %953 = vmatprep.subr.mxu0 0.0
    %954 = vmatpush1.msra.mxu0 %v16
    %955 = vmatprep.subr.mxu0 0.0
    %956 = vmatpush1.msra.mxu0 %v203
    %957 = vmatprep.subr.mxu0 0.0
    %958 = vmatpush1.msra.mxu0 0.0
    %959 = vmatprep.subr.mxu0 0.0
    %960 = vmatpush1.msra.mxu0 0.0
    %961 = vmatprep.subr.mxu0 0.0
    %962 = vmatpush1.msra.mxu0 0.0
    %963 = vmatprep.subr.mxu0 0.0
    %964 = vmatpush1.msra.mxu0 0.0
    %965 = vmatprep.subr.mxu0 0.0
    %966 = vmatpush1.msra.mxu0 0.0
    %967 = vmatprep.subr.mxu0 0.0
    %968 = vmatpush1.msra.mxu0 0.0
    %969 = vmatprep.subr.mxu0 0.0
    %970 = vmatpush1.msra.mxu0 0.0
    %971 = vmatprep.subr.mxu0 0.0
    %972 = vmatpush1.msra.mxu0 0.0
    %973 = vmatprep.subr.mxu0 0.0
    %974 = vmatpush1.msra.mxu0 0.0
    %975 = vmatprep.subr.mxu0 0.0
    %976 = vmatpush1.msra.mxu0 0.0
    %977 = vmatprep.subr.mxu0 0.0
    %978 = vmatpush1.msra.mxu0 0.0
    %979 = vmatprep.subr.mxu0 0.0
    %980 = vmatpush1.msra.mxu0 0.0
    %981 = vmatprep.subr.mxu0 0.0
    %982 = vmatpush1.msra.mxu0 0.0
    %983 = vmatprep.subr.mxu0 0.0
    %984 = vmatpush1.msra.mxu0 0.0
    %985 = vmatprep.subr.mxu0 0.0
    %986 = vmatpush1.msra.mxu0 0.0
    %987 = vmatprep.subr.mxu0 0.0
    %988 = vmatpush1.msra.mxu0 0.0
    %989 = vmatprep.subr.mxu0 0.0
    %990 = vmatpush1.msra.mxu0 0.0
    %991 = vmatprep.subr.mxu0 0.0
    %992 = vmatpush1.msra.mxu0 0.0
    %993 = vmatprep.subr.mxu0 0.0
    %994 = vmatpush1.msra.mxu0 0.0
    %995 = vmatprep.subr.mxu0 0.0
    %996 = vmatpush1.msra.mxu0 0.0
    %997 = vmatprep.subr.mxu0 0.0
    %998 = vmatpush1.msra.mxu0 0.0
    %999 = vmatprep.subr.mxu0 0.0
    %1000 = vmatpush1.msra.mxu0 0.0
    %1001 = vmatprep.subr.mxu0 0.0
    %1002 = vmatpush1.msra.mxu0 0.0
    %1003 = vmatprep.subr.mxu0 0.0
    %1004 = vmatpush1.msra.mxu0 0.0
    %1005 = vmatprep.subr.mxu0 0.0
    %1006 = vmatpush1.msra.mxu0 0.0
    %1007 = vmatprep.subr.mxu0 0.0
    %1008 = vmatpush1.msra.mxu0 0.0
    %1009 = vmatprep.subr.mxu0 0.0
    %1010 = vmatpush1.msra.mxu0 0.0
    %1011 = vmatprep.subr.mxu0 0.0
    %1012 = vmatpush1.msra.mxu0 0.0
    %1013 = vmatprep.subr.mxu0 0.0
    %1014 = vmatpush1.msra.mxu0 0.0
    %1015 = vmatprep.subr.mxu0 0.0
    %1016 = vmatpush1.msra.mxu0 0.0
    %1017 = vmatprep.mubr.f32.mxu0 0.0
    %1018 = vmatmul.mubr.f32.gmra.mrb[0].mxu0 %v951
    %v1019 = vpop.f32.mrb[0].mxu0
    %v1020 = vadd.f32 0.0, %v1019
    %v1021 = vpop.f32.mrb[0].mxu0
    %1022 = vdwg.mxu0
    %v1024 = vrot.slane %v1020, 7
    %v1026 = vadd.f32 %v108, %v1024
    %v1027 = vxor.u32 %v1026, 2147483648
    %v1028 = vmul.f32 %v1027, 1.442695
    %v1029 = vpow.pop %v1028
    %v1030 = vadd.f32 %v1029, 1.0
    %v1031 = vrcp.pop %v1030
    %v1032 = vmul.f32 1.0, %v1031
    %v1034 = vrot.slane %v1032, 1
    %v1035 = vsel %vm197, %v1034, 0
    %v1038 = vsel %vm201, %v21, 0
    %1040 = vmatprep.subr.mxu0 0.0
    %1041 = vmatpush1.msra.mxu0 %v20
    %1042 = vmatprep.subr.mxu0 0.0
    %1043 = vmatpush1.msra.mxu0 %v1038
    %1044 = vmatprep.subr.mxu0 0.0
    %1045 = vmatpush1.msra.mxu0 0.0
    %1046 = vmatprep.subr.mxu0 0.0
    %1047 = vmatpush1.msra.mxu0 0.0
    %1048 = vmatprep.subr.mxu0 0.0
    %1049 = vmatpush1.msra.mxu0 0.0
    %1050 = vmatprep.subr.mxu0 0.0
    %1051 = vmatpush1.msra.mxu0 0.0
    %1052 = vmatprep.subr.mxu0 0.0
    %1053 = vmatpush1.msra.mxu0 0.0
    %1054 = vmatprep.subr.mxu0 0.0
    %1055 = vmatpush1.msra.mxu0 0.0
    %1056 = vmatprep.subr.mxu0 0.0
    %1057 = vmatpush1.msra.mxu0 0.0
    %1058 = vmatprep.subr.mxu0 0.0
    %1059 = vmatpush1.msra.mxu0 0.0
    %1060 = vmatprep.subr.mxu0 0.0
    %1061 = vmatpush1.msra.mxu0 0.0
    %1062 = vmatprep.subr.mxu0 0.0
    %1063 = vmatpush1.msra.mxu0 0.0
    %1064 = vmatprep.subr.mxu0 0.0
    %1065 = vmatpush1.msra.mxu0 0.0
    %1066 = vmatprep.subr.mxu0 0.0
    %1067 = vmatpush1.msra.mxu0 0.0
    %1068 = vmatprep.subr.mxu0 0.0
    %1069 = vmatpush1.msra.mxu0 0.0
    %1070 = vmatprep.subr.mxu0 0.0
    %1071 = vmatpush1.msra.mxu0 0.0
    %1072 = vmatprep.subr.mxu0 0.0
    %1073 = vmatpush1.msra.mxu0 0.0
    %1074 = vmatprep.subr.mxu0 0.0
    %1075 = vmatpush1.msra.mxu0 0.0
    %1076 = vmatprep.subr.mxu0 0.0
    %1077 = vmatpush1.msra.mxu0 0.0
    %1078 = vmatprep.subr.mxu0 0.0
    %1079 = vmatpush1.msra.mxu0 0.0
    %1080 = vmatprep.subr.mxu0 0.0
    %1081 = vmatpush1.msra.mxu0 0.0
    %1082 = vmatprep.subr.mxu0 0.0
    %1083 = vmatpush1.msra.mxu0 0.0
    %1084 = vmatprep.subr.mxu0 0.0
    %1085 = vmatpush1.msra.mxu0 0.0
    %1086 = vmatprep.subr.mxu0 0.0
    %1087 = vmatpush1.msra.mxu0 0.0
    %1088 = vmatprep.subr.mxu0 0.0
    %1089 = vmatpush1.msra.mxu0 0.0
    %1090 = vmatprep.subr.mxu0 0.0
    %1091 = vmatpush1.msra.mxu0 0.0
    %1092 = vmatprep.subr.mxu0 0.0
    %1093 = vmatpush1.msra.mxu0 0.0
    %1094 = vmatprep.subr.mxu0 0.0
    %1095 = vmatpush1.msra.mxu0 0.0
    %1096 = vmatprep.subr.mxu0 0.0
    %1097 = vmatpush1.msra.mxu0 0.0
    %1098 = vmatprep.subr.mxu0 0.0
    %1099 = vmatpush1.msra.mxu0 0.0
    %1100 = vmatprep.subr.mxu0 0.0
    %1101 = vmatpush1.msra.mxu0 0.0
    %1102 = vmatprep.subr.mxu0 0.0
    %1103 = vmatpush1.msra.mxu0 0.0
    %1104 = vmatprep.mubr.f32.mxu0 0.0
    %1105 = vmatmul.mubr.f32.gmra.mrb[0].mxu0 %v1035
    %v1106 = vpop.f32.mrb[0].mxu0
    %v1107 = vadd.f32 0.0, %v1106
    %v1108 = vpop.f32.mrb[0].mxu0
    %1109 = vdwg.mxu0
    %v1111 = vsel %vm25, %v24, 0
    %1113 = vmatprep.subr.mxu0 0.0
    %1114 = vmatpush1.msra.mxu0 %v18
    %1115 = vmatprep.subr.mxu0 0.0
    %1116 = vmatpush1.msra.mxu0 %v118
    %1117 = vmatprep.subr.mxu0 0.0
    %1118 = vmatpush1.msra.mxu0 0.0
    %1119 = vmatprep.subr.mxu0 0.0
    %1120 = vmatpush1.msra.mxu0 0.0
    %1121 = vmatprep.subr.mxu0 0.0
    %1122 = vmatpush1.msra.mxu0 0.0
    %1123 = vmatprep.subr.mxu0 0.0
    %1124 = vmatpush1.msra.mxu0 0.0
    %1125 = vmatprep.subr.mxu0 0.0
    %1126 = vmatpush1.msra.mxu0 0.0
    %1127 = vmatprep.subr.mxu0 0.0
    %1128 = vmatpush1.msra.mxu0 0.0
    %1129 = vmatprep.subr.mxu0 0.0
    %1130 = vmatpush1.msra.mxu0 0.0
    %1131 = vmatprep.subr.mxu0 0.0
    %1132 = vmatpush1.msra.mxu0 0.0
    %1133 = vmatprep.subr.mxu0 0.0
    %1134 = vmatpush1.msra.mxu0 0.0
    %1135 = vmatprep.subr.mxu0 0.0
    %1136 = vmatpush1.msra.mxu0 0.0
    %1137 = vmatprep.subr.mxu0 0.0
    %1138 = vmatpush1.msra.mxu0 0.0
    %1139 = vmatprep.subr.mxu0 0.0
    %1140 = vmatpush1.msra.mxu0 0.0
    %1141 = vmatprep.subr.mxu0 0.0
    %1142 = vmatpush1.msra.mxu0 0.0
    %1143 = vmatprep.subr.mxu0 0.0
    %1144 = vmatpush1.msra.mxu0 0.0
    %1145 = vmatprep.subr.mxu0 0.0
    %1146 = vmatpush1.msra.mxu0 0.0
    %1147 = vmatprep.subr.mxu0 0.0
    %1148 = vmatpush1.msra.mxu0 0.0
    %1149 = vmatprep.subr.mxu0 0.0
    %1150 = vmatpush1.msra.mxu0 0.0
    %1151 = vmatprep.subr.mxu0 0.0
    %1152 = vmatpush1.msra.mxu0 0.0
    %1153 = vmatprep.subr.mxu0 0.0
    %1154 = vmatpush1.msra.mxu0 0.0
    %1155 = vmatprep.subr.mxu0 0.0
    %1156 = vmatpush1.msra.mxu0 0.0
    %1157 = vmatprep.subr.mxu0 0.0
    %1158 = vmatpush1.msra.mxu0 0.0
    %1159 = vmatprep.subr.mxu0 0.0
    %1160 = vmatpush1.msra.mxu0 0.0
    %1161 = vmatprep.subr.mxu0 0.0
    %1162 = vmatpush1.msra.mxu0 0.0
    %1163 = vmatprep.subr.mxu0 0.0
    %1164 = vmatpush1.msra.mxu0 0.0
    %1165 = vmatprep.subr.mxu0 0.0
    %1166 = vmatpush1.msra.mxu0 0.0
    %1167 = vmatprep.subr.mxu0 0.0
    %1168 = vmatpush1.msra.mxu0 0.0
    %1169 = vmatprep.subr.mxu0 0.0
    %1170 = vmatpush1.msra.mxu0 0.0
    %1171 = vmatprep.subr.mxu0 0.0
    %1172 = vmatpush1.msra.mxu0 0.0
    %1173 = vmatprep.subr.mxu0 0.0
    %1174 = vmatpush1.msra.mxu0 0.0
    %1175 = vmatprep.subr.mxu0 0.0
    %1176 = vmatpush1.msra.mxu0 0.0
    %1177 = vmatprep.mubr.f32.mxu0 0.0
    %1178 = vmatmul.mubr.f32.gmra.mrb[0].mxu0 %v1111
    %v1179 = vpop.f32.mrb[0].mxu0
    %v1180 = vadd.f32 %v1107, %v1179
    %v1181 = vpop.f32.mrb[0].mxu0
    %1182 = vdwg.mxu0
    %v1183 = vxor.u32 %v1180, 2147483648
    %v1184 = vmul.f32 %v1183, 1.442695
    %v1185 = vpow.pop %v1184
    %v1186 = vadd.f32 %v1185, 1.0
    %v1187 = vrcp.pop %v1186
    %v1188 = vmul.f32 1.0, %v1187
    %v1190 = vsel %vm197, %v1188, 0
    %v1193 = vsel %vm201, %v196, 0
    %1195 = vmatprep.subr.mxu0 0.0
    %1196 = vmatpush1.msra.mxu0 %v195
    %1197 = vmatprep.subr.mxu0 0.0
    %1198 = vmatpush1.msra.mxu0 %v1193
    %1199 = vmatprep.subr.mxu0 0.0
    %1200 = vmatpush1.msra.mxu0 0.0
    %1201 = vmatprep.subr.mxu0 0.0
    %1202 = vmatpush1.msra.mxu0 0.0
    %1203 = vmatprep.subr.mxu0 0.0
    %1204 = vmatpush1.msra.mxu0 0.0
    %1205 = vmatprep.subr.mxu0 0.0
    %1206 = vmatpush1.msra.mxu0 0.0
    %1207 = vmatprep.subr.mxu0 0.0
    %1208 = vmatpush1.msra.mxu0 0.0
    %1209 = vmatprep.subr.mxu0 0.0
    %1210 = vmatpush1.msra.mxu0 0.0
    %1211 = vmatprep.subr.mxu0 0.0
    %1212 = vmatpush1.msra.mxu0 0.0
    %1213 = vmatprep.subr.mxu0 0.0
    %1214 = vmatpush1.msra.mxu0 0.0
    %1215 = vmatprep.subr.mxu0 0.0
    %1216 = vmatpush1.msra.mxu0 0.0
    %1217 = vmatprep.subr.mxu0 0.0
    %1218 = vmatpush1.msra.mxu0 0.0
    %1219 = vmatprep.subr.mxu0 0.0
    %1220 = vmatpush1.msra.mxu0 0.0
    %1221 = vmatprep.subr.mxu0 0.0
    %1222 = vmatpush1.msra.mxu0 0.0
    %1223 = vmatprep.subr.mxu0 0.0
    %1224 = vmatpush1.msra.mxu0 0.0
    %1225 = vmatprep.subr.mxu0 0.0
    %1226 = vmatpush1.msra.mxu0 0.0
    %1227 = vmatprep.subr.mxu0 0.0
    %1228 = vmatpush1.msra.mxu0 0.0
    %1229 = vmatprep.subr.mxu0 0.0
    %1230 = vmatpush1.msra.mxu0 0.0
    %1231 = vmatprep.subr.mxu0 0.0
    %1232 = vmatpush1.msra.mxu0 0.0
    %1233 = vmatprep.subr.mxu0 0.0
    %1234 = vmatpush1.msra.mxu0 0.0
    %1235 = vmatprep.subr.mxu0 0.0
    %1236 = vmatpush1.msra.mxu0 0.0
    %1237 = vmatprep.subr.mxu0 0.0
    %1238 = vmatpush1.msra.mxu0 0.0
    %1239 = vmatprep.subr.mxu0 0.0
    %1240 = vmatpush1.msra.mxu0 0.0
    %1241 = vmatprep.subr.mxu0 0.0
    %1242 = vmatpush1.msra.mxu0 0.0
    %1243 = vmatprep.subr.mxu0 0.0
    %1244 = vmatpush1.msra.mxu0 0.0
    %1245 = vmatprep.subr.mxu0 0.0
    %1246 = vmatpush1.msra.mxu0 0.0
    %1247 = vmatprep.subr.mxu0 0.0
    %1248 = vmatpush1.msra.mxu0 0.0
    %1249 = vmatprep.subr.mxu0 0.0
    %1250 = vmatpush1.msra.mxu0 0.0
    %1251 = vmatprep.subr.mxu0 0.0
    %1252 = vmatpush1.msra.mxu0 0.0
    %1253 = vmatprep.subr.mxu0 0.0
    %1254 = vmatpush1.msra.mxu0 0.0
    %1255 = vmatprep.subr.mxu0 0.0
    %1256 = vmatpush1.msra.mxu0 0.0
    %1257 = vmatprep.subr.mxu0 0.0
    %1258 = vmatpush1.msra.mxu0 0.0
    %1259 = vmatprep.mubr.f32.mxu0 0.0
    %1260 = vmatmul.mubr.f32.gmra.mrb[0].mxu0 %v1190
    %v1261 = vpop.f32.mrb[0].mxu0
    %v1262 = vadd.f32 0.0, %v1261
    %v1263 = vpop.f32.mrb[0].mxu0
    %1264 = vdwg.mxu0
    %v1265 = vxor.u32 %v1262, 2147483648
    %v1266 = vmul.f32 %v1265, 1.442695
    %v1267 = vpow.pop %v1266
    %v1268 = vadd.f32 %v1267, 1.0
    %v1269 = vrcp.pop %v1268
    %v1270 = vmul.f32 1.0, %v1269
    %v1272 = vsel %vm197, %v1270, 0
    %1274 = vmatprep.subr.mxu0 0.0
    %1275 = vmatpush1.msra.mxu0 %v195
    %1276 = vmatprep.subr.mxu0 0.0
    %1277 = vmatpush1.msra.mxu0 %v1193
    %1278 = vmatprep.subr.mxu0 0.0
    %1279 = vmatpush1.msra.mxu0 0.0
    %1280 = vmatprep.subr.mxu0 0.0
    %1281 = vmatpush1.msra.mxu0 0.0
    %1282 = vmatprep.subr.mxu0 0.0
    %1283 = vmatpush1.msra.mxu0 0.0
    %1284 = vmatprep.subr.mxu0 0.0
    %1285 = vmatpush1.msra.mxu0 0.0
    %1286 = vmatprep.subr.mxu0 0.0
    %1287 = vmatpush1.msra.mxu0 0.0
    %1288 = vmatprep.subr.mxu0 0.0
    %1289 = vmatpush1.msra.mxu0 0.0
    %1290 = vmatprep.subr.mxu0 0.0
    %1291 = vmatpush1.msra.mxu0 0.0
    %1292 = vmatprep.subr.mxu0 0.0
    %1293 = vmatpush1.msra.mxu0 0.0
    %1294 = vmatprep.subr.mxu0 0.0
    %1295 = vmatpush1.msra.mxu0 0.0
    %1296 = vmatprep.subr.mxu0 0.0
    %1297 = vmatpush1.msra.mxu0 0.0
    %1298 = vmatprep.subr.mxu0 0.0
    %1299 = vmatpush1.msra.mxu0 0.0
    %1300 = vmatprep.subr.mxu0 0.0
    %1301 = vmatpush1.msra.mxu0 0.0
    %1302 = vmatprep.subr.mxu0 0.0
    %1303 = vmatpush1.msra.mxu0 0.0
    %1304 = vmatprep.subr.mxu0 0.0
    %1305 = vmatpush1.msra.mxu0 0.0
    %1306 = vmatprep.subr.mxu0 0.0
    %1307 = vmatpush1.msra.mxu0 0.0
    %1308 = vmatprep.subr.mxu0 0.0
    %1309 = vmatpush1.msra.mxu0 0.0
    %1310 = vmatprep.subr.mxu0 0.0
    %1311 = vmatpush1.msra.mxu0 0.0
    %1312 = vmatprep.subr.mxu0 0.0
    %1313 = vmatpush1.msra.mxu0 0.0
    %1314 = vmatprep.subr.mxu0 0.0
    %1315 = vmatpush1.msra.mxu0 0.0
    %1316 = vmatprep.subr.mxu0 0.0
    %1317 = vmatpush1.msra.mxu0 0.0
    %1318 = vmatprep.subr.mxu0 0.0
    %1319 = vmatpush1.msra.mxu0 0.0
    %1320 = vmatprep.subr.mxu0 0.0
    %1321 = vmatpush1.msra.mxu0 0.0
    %1322 = vmatprep.subr.mxu0 0.0
    %1323 = vmatpush1.msra.mxu0 0.0
    %1324 = vmatprep.subr.mxu0 0.0
    %1325 = vmatpush1.msra.mxu0 0.0
    %1326 = vmatprep.subr.mxu0 0.0
    %1327 = vmatpush1.msra.mxu0 0.0
    %1328 = vmatprep.subr.mxu0 0.0
    %1329 = vmatpush1.msra.mxu0 0.0
    %1330 = vmatprep.subr.mxu0 0.0
    %1331 = vmatpush1.msra.mxu0 0.0
    %1332 = vmatprep.subr.mxu0 0.0
    %1333 = vmatpush1.msra.mxu0 0.0
    %1334 = vmatprep.subr.mxu0 0.0
    %1335 = vmatpush1.msra.mxu0 0.0
    %1336 = vmatprep.subr.mxu0 0.0
    %1337 = vmatpush1.msra.mxu0 0.0
    %1338 = vmatprep.mubr.f32.mxu0 0.0
    %1339 = vmatmul.mubr.f32.gmra.mrb[0].mxu0 %v1272
    %v1340 = vpop.f32.mrb[0].mxu0
    %v1341 = vadd.f32 0.0, %v1340
    %v1342 = vpop.f32.mrb[0].mxu0
    %1343 = vdwg.mxu0
    %v1344 = vxor.u32 %v1341, 2147483648
    %v1345 = vmul.f32 %v1344, 1.442695
    %v1346 = vpow.pop %v1345
    %v1347 = vadd.f32 %v1346, 1.0
    %v1348 = vrcp.pop %v1347
    %v1349 = vmul.f32 1.0, %v1348
    %v1351 = vsel %vm197, %v1349, 0
    %1353 = vmatprep.subr.mxu0 0.0
    %1354 = vmatpush1.msra.mxu0 %v195
    %1355 = vmatprep.subr.mxu0 0.0
    %1356 = vmatpush1.msra.mxu0 %v1193
    %1357 = vmatprep.subr.mxu0 0.0
    %1358 = vmatpush1.msra.mxu0 0.0
    %1359 = vmatprep.subr.mxu0 0.0
    %1360 = vmatpush1.msra.mxu0 0.0
    %1361 = vmatprep.subr.mxu0 0.0
    %1362 = vmatpush1.msra.mxu0 0.0
    %1363 = vmatprep.subr.mxu0 0.0
    %1364 = vmatpush1.msra.mxu0 0.0
    %1365 = vmatprep.subr.mxu0 0.0
    %1366 = vmatpush1.msra.mxu0 0.0
    %1367 = vmatprep.subr.mxu0 0.0
    %1368 = vmatpush1.msra.mxu0 0.0
    %1369 = vmatprep.subr.mxu0 0.0
    %1370 = vmatpush1.msra.mxu0 0.0
    %1371 = vmatprep.subr.mxu0 0.0
    %1372 = vmatpush1.msra.mxu0 0.0
    %1373 = vmatprep.subr.mxu0 0.0
    %1374 = vmatpush1.msra.mxu0 0.0
    %1375 = vmatprep.subr.mxu0 0.0
    %1376 = vmatpush1.msra.mxu0 0.0
    %1377 = vmatprep.subr.mxu0 0.0
    %1378 = vmatpush1.msra.mxu0 0.0
    %1379 = vmatprep.subr.mxu0 0.0
    %1380 = vmatpush1.msra.mxu0 0.0
    %1381 = vmatprep.subr.mxu0 0.0
    %1382 = vmatpush1.msra.mxu0 0.0
    %1383 = vmatprep.subr.mxu0 0.0
    %1384 = vmatpush1.msra.mxu0 0.0
    %1385 = vmatprep.subr.mxu0 0.0
    %1386 = vmatpush1.msra.mxu0 0.0
    %1387 = vmatprep.subr.mxu0 0.0
    %1388 = vmatpush1.msra.mxu0 0.0
    %1389 = vmatprep.subr.mxu0 0.0
    %1390 = vmatpush1.msra.mxu0 0.0
    %1391 = vmatprep.subr.mxu0 0.0
    %1392 = vmatpush1.msra.mxu0 0.0
    %1393 = vmatprep.subr.mxu0 0.0
    %1394 = vmatpush1.msra.mxu0 0.0
    %1395 = vmatprep.subr.mxu0 0.0
    %1396 = vmatpush1.msra.mxu0 0.0
    %1397 = vmatprep.subr.mxu0 0.0
    %1398 = vmatpush1.msra.mxu0 0.0
    %1399 = vmatprep.subr.mxu0 0.0
    %1400 = vmatpush1.msra.mxu0 0.0
    %1401 = vmatprep.subr.mxu0 0.0
    %1402 = vmatpush1.msra.mxu0 0.0
    %1403 = vmatprep.subr.mxu0 0.0
    %1404 = vmatpush1.msra.mxu0 0.0
    %1405 = vmatprep.subr.mxu0 0.0
    %1406 = vmatpush1.msra.mxu0 0.0
    %1407 = vmatprep.subr.mxu0 0.0
    %1408 = vmatpush1.msra.mxu0 0.0
    %1409 = vmatprep.subr.mxu0 0.0
    %1410 = vmatpush1.msra.mxu0 0.0
    %1411 = vmatprep.subr.mxu0 0.0
    %1412 = vmatpush1.msra.mxu0 0.0
    %1413 = vmatprep.subr.mxu0 0.0
    %1414 = vmatpush1.msra.mxu0 0.0
    %1415 = vmatprep.subr.mxu0 0.0
    %1416 = vmatpush1.msra.mxu0 0.0
    %1417 = vmatprep.mubr.f32.mxu0 0.0
    %1418 = vmatmul.mubr.f32.gmra.mrb[0].mxu0 %v1351
    %v1419 = vpop.f32.mrb[0].mxu0
    %v1420 = vadd.f32 0.0, %v1419
    %v1421 = vpop.f32.mrb[0].mxu0
    %1422 = vdwg.mxu0
    %v1423 = vxor.u32 %v1420, 2147483648
    %v1424 = vmul.f32 %v1423, 1.442695
    %v1425 = vpow.pop %v1424
    %v1426 = vadd.f32 %v1425, 1.0
    %v1427 = vrcp.pop %v1426
    %v1428 = vmul.f32 1.0, %v1427
    %v1430 = vsel %vm197, %v1428, 0
    %1432 = vmatprep.subr.mxu0 0.0
    %1433 = vmatpush1.msra.mxu0 %v195
    %1434 = vmatprep.subr.mxu0 0.0
    %1435 = vmatpush1.msra.mxu0 %v1193
    %1436 = vmatprep.subr.mxu0 0.0
    %1437 = vmatpush1.msra.mxu0 0.0
    %1438 = vmatprep.subr.mxu0 0.0
    %1439 = vmatpush1.msra.mxu0 0.0
    %1440 = vmatprep.subr.mxu0 0.0
    %1441 = vmatpush1.msra.mxu0 0.0
    %1442 = vmatprep.subr.mxu0 0.0
    %1443 = vmatpush1.msra.mxu0 0.0
    %1444 = vmatprep.subr.mxu0 0.0
    %1445 = vmatpush1.msra.mxu0 0.0
    %1446 = vmatprep.subr.mxu0 0.0
    %1447 = vmatpush1.msra.mxu0 0.0
    %1448 = vmatprep.subr.mxu0 0.0
    %1449 = vmatpush1.msra.mxu0 0.0
    %1450 = vmatprep.subr.mxu0 0.0
    %1451 = vmatpush1.msra.mxu0 0.0
    %1452 = vmatprep.subr.mxu0 0.0
    %1453 = vmatpush1.msra.mxu0 0.0
    %1454 = vmatprep.subr.mxu0 0.0
    %1455 = vmatpush1.msra.mxu0 0.0
    %1456 = vmatprep.subr.mxu0 0.0
    %1457 = vmatpush1.msra.mxu0 0.0
    %1458 = vmatprep.subr.mxu0 0.0
    %1459 = vmatpush1.msra.mxu0 0.0
    %1460 = vmatprep.subr.mxu0 0.0
    %1461 = vmatpush1.msra.mxu0 0.0
    %1462 = vmatprep.subr.mxu0 0.0
    %1463 = vmatpush1.msra.mxu0 0.0
    %1464 = vmatprep.subr.mxu0 0.0
    %1465 = vmatpush1.msra.mxu0 0.0
    %1466 = vmatprep.subr.mxu0 0.0
    %1467 = vmatpush1.msra.mxu0 0.0
    %1468 = vmatprep.subr.mxu0 0.0
    %1469 = vmatpush1.msra.mxu0 0.0
    %1470 = vmatprep.subr.mxu0 0.0
    %1471 = vmatpush1.msra.mxu0 0.0
    %1472 = vmatprep.subr.mxu0 0.0
    %1473 = vmatpush1.msra.mxu0 0.0
    %1474 = vmatprep.subr.mxu0 0.0
    %1475 = vmatpush1.msra.mxu0 0.0
    %1476 = vmatprep.subr.mxu0 0.0
    %1477 = vmatpush1.msra.mxu0 0.0
    %1478 = vmatprep.subr.mxu0 0.0
    %1479 = vmatpush1.msra.mxu0 0.0
    %1480 = vmatprep.subr.mxu0 0.0
    %1481 = vmatpush1.msra.mxu0 0.0
    %1482 = vmatprep.subr.mxu0 0.0
    %1483 = vmatpush1.msra.mxu0 0.0
    %1484 = vmatprep.subr.mxu0 0.0
    %1485 = vmatpush1.msra.mxu0 0.0
    %1486 = vmatprep.subr.mxu0 0.0
    %1487 = vmatpush1.msra.mxu0 0.0
    %1488 = vmatprep.subr.mxu0 0.0
    %1489 = vmatpush1.msra.mxu0 0.0
    %1490 = vmatprep.subr.mxu0 0.0
    %1491 = vmatpush1.msra.mxu0 0.0
    %1492 = vmatprep.subr.mxu0 0.0
    %1493 = vmatpush1.msra.mxu0 0.0
    %1494 = vmatprep.subr.mxu0 0.0
    %1495 = vmatpush1.msra.mxu0 0.0
    %1496 = vmatprep.mubr.f32.mxu0 0.0
    %1497 = vmatmul.mubr.f32.gmra.mrb[0].mxu0 %v1430
    %v1498 = vpop.f32.mrb[0].mxu0
    %v1499 = vadd.f32 0.0, %v1498
    %v1500 = vpop.f32.mrb[0].mxu0
    %1501 = vdwg.mxu0
    %v1502 = vxor.u32 %v1499, 2147483648
    %v1503 = vmul.f32 %v1502, 1.442695
    %v1504 = vpow.pop %v1503
    %v1505 = vadd.f32 %v1504, 1.0
    %v1506 = vrcp.pop %v1505
    %v1507 = vmul.f32 1.0, %v1506
    %v1509 = vsel %vm197, %v1507, 0
    %1511 = vmatprep.subr.mxu0 0.0
    %1512 = vmatpush1.msra.mxu0 %v195
    %1513 = vmatprep.subr.mxu0 0.0
    %1514 = vmatpush1.msra.mxu0 %v1193
    %1515 = vmatprep.subr.mxu0 0.0
    %1516 = vmatpush1.msra.mxu0 0.0
    %1517 = vmatprep.subr.mxu0 0.0
    %1518 = vmatpush1.msra.mxu0 0.0
    %1519 = vmatprep.subr.mxu0 0.0
    %1520 = vmatpush1.msra.mxu0 0.0
    %1521 = vmatprep.subr.mxu0 0.0
    %1522 = vmatpush1.msra.mxu0 0.0
    %1523 = vmatprep.subr.mxu0 0.0
    %1524 = vmatpush1.msra.mxu0 0.0
    %1525 = vmatprep.subr.mxu0 0.0
    %1526 = vmatpush1.msra.mxu0 0.0
    %1527 = vmatprep.subr.mxu0 0.0
    %1528 = vmatpush1.msra.mxu0 0.0
    %1529 = vmatprep.subr.mxu0 0.0
    %1530 = vmatpush1.msra.mxu0 0.0
    %1531 = vmatprep.subr.mxu0 0.0
    %1532 = vmatpush1.msra.mxu0 0.0
    %1533 = vmatprep.subr.mxu0 0.0
    %1534 = vmatpush1.msra.mxu0 0.0
    %1535 = vmatprep.subr.mxu0 0.0
    %1536 = vmatpush1.msra.mxu0 0.0
    %1537 = vmatprep.subr.mxu0 0.0
    %1538 = vmatpush1.msra.mxu0 0.0
    %1539 = vmatprep.subr.mxu0 0.0
    %1540 = vmatpush1.msra.mxu0 0.0
    %1541 = vmatprep.subr.mxu0 0.0
    %1542 = vmatpush1.msra.mxu0 0.0
    %1543 = vmatprep.subr.mxu0 0.0
    %1544 = vmatpush1.msra.mxu0 0.0
    %1545 = vmatprep.subr.mxu0 0.0
    %1546 = vmatpush1.msra.mxu0 0.0
    %1547 = vmatprep.subr.mxu0 0.0
    %1548 = vmatpush1.msra.mxu0 0.0
    %1549 = vmatprep.subr.mxu0 0.0
    %1550 = vmatpush1.msra.mxu0 0.0
    %1551 = vmatprep.subr.mxu0 0.0
    %1552 = vmatpush1.msra.mxu0 0.0
    %1553 = vmatprep.subr.mxu0 0.0
    %1554 = vmatpush1.msra.mxu0 0.0
    %1555 = vmatprep.subr.mxu0 0.0
    %1556 = vmatpush1.msra.mxu0 0.0
    %1557 = vmatprep.subr.mxu0 0.0
    %1558 = vmatpush1.msra.mxu0 0.0
    %1559 = vmatprep.subr.mxu0 0.0
    %1560 = vmatpush1.msra.mxu0 0.0
    %1561 = vmatprep.subr.mxu0 0.0
    %1562 = vmatpush1.msra.mxu0 0.0
    %1563 = vmatprep.subr.mxu0 0.0
    %1564 = vmatpush1.msra.mxu0 0.0
    %1565 = vmatprep.subr.mxu0 0.0
    %1566 = vmatpush1.msra.mxu0 0.0
    %1567 = vmatprep.subr.mxu0 0.0
    %1568 = vmatpush1.msra.mxu0 0.0
    %1569 = vmatprep.subr.mxu0 0.0
    %1570 = vmatpush1.msra.mxu0 0.0
    %1571 = vmatprep.subr.mxu0 0.0
    %1572 = vmatpush1.msra.mxu0 0.0
    %1573 = vmatprep.subr.mxu0 0.0
    %1574 = vmatpush1.msra.mxu0 0.0
    %1575 = vmatprep.mubr.f32.mxu0 0.0
    %1576 = vmatmul.mubr.f32.gmra.mrb[0].mxu0 %v1509
    %v1577 = vpop.f32.mrb[0].mxu0
    %v1578 = vadd.f32 0.0, %v1577
    %v1579 = vpop.f32.mrb[0].mxu0
    %1580 = vdwg.mxu0
    %v1581 = vxor.u32 %v1578, 2147483648
    %v1582 = vmul.f32 %v1581, 1.442695
    %v1583 = vpow.pop %v1582
    %v1584 = vadd.f32 %v1583, 1.0
    %v1585 = vrcp.pop %v1584
    %v1586 = vmul.f32 1.0, %v1585
    %v1588 = vsel %vm197, %v1586, 0
    %1590 = vmatprep.subr.mxu0 0.0
    %1591 = vmatpush1.msra.mxu0 %v195
    %1592 = vmatprep.subr.mxu0 0.0
    %1593 = vmatpush1.msra.mxu0 %v1193
    %1594 = vmatprep.subr.mxu0 0.0
    %1595 = vmatpush1.msra.mxu0 0.0
    %1596 = vmatprep.subr.mxu0 0.0
    %1597 = vmatpush1.msra.mxu0 0.0
    %1598 = vmatprep.subr.mxu0 0.0
    %1599 = vmatpush1.msra.mxu0 0.0
    %1600 = vmatprep.subr.mxu0 0.0
    %1601 = vmatpush1.msra.mxu0 0.0
    %1602 = vmatprep.subr.mxu0 0.0
    %1603 = vmatpush1.msra.mxu0 0.0
    %1604 = vmatprep.subr.mxu0 0.0
    %1605 = vmatpush1.msra.mxu0 0.0
    %1606 = vmatprep.subr.mxu0 0.0
    %1607 = vmatpush1.msra.mxu0 0.0
    %1608 = vmatprep.subr.mxu0 0.0
    %1609 = vmatpush1.msra.mxu0 0.0
    %1610 = vmatprep.subr.mxu0 0.0
    %1611 = vmatpush1.msra.mxu0 0.0
    %1612 = vmatprep.subr.mxu0 0.0
    %1613 = vmatpush1.msra.mxu0 0.0
    %1614 = vmatprep.subr.mxu0 0.0
    %1615 = vmatpush1.msra.mxu0 0.0
    %1616 = vmatprep.subr.mxu0 0.0
    %1617 = vmatpush1.msra.mxu0 0.0
    %1618 = vmatprep.subr.mxu0 0.0
    %1619 = vmatpush1.msra.mxu0 0.0
    %1620 = vmatprep.subr.mxu0 0.0
    %1621 = vmatpush1.msra.mxu0 0.0
    %1622 = vmatprep.subr.mxu0 0.0
    %1623 = vmatpush1.msra.mxu0 0.0
    %1624 = vmatprep.subr.mxu0 0.0
    %1625 = vmatpush1.msra.mxu0 0.0
    %1626 = vmatprep.subr.mxu0 0.0
    %1627 = vmatpush1.msra.mxu0 0.0
    %1628 = vmatprep.subr.mxu0 0.0
    %1629 = vmatpush1.msra.mxu0 0.0
    %1630 = vmatprep.subr.mxu0 0.0
    %1631 = vmatpush1.msra.mxu0 0.0
    %1632 = vmatprep.subr.mxu0 0.0
    %1633 = vmatpush1.msra.mxu0 0.0
    %1634 = vmatprep.subr.mxu0 0.0
    %1635 = vmatpush1.msra.mxu0 0.0
    %1636 = vmatprep.subr.mxu0 0.0
    %1637 = vmatpush1.msra.mxu0 0.0
    %1638 = vmatprep.subr.mxu0 0.0
    %1639 = vmatpush1.msra.mxu0 0.0
    %1640 = vmatprep.subr.mxu0 0.0
    %1641 = vmatpush1.msra.mxu0 0.0
    %1642 = vmatprep.subr.mxu0 0.0
    %1643 = vmatpush1.msra.mxu0 0.0
    %1644 = vmatprep.subr.mxu0 0.0
    %1645 = vmatpush1.msra.mxu0 0.0
    %1646 = vmatprep.subr.mxu0 0.0
    %1647 = vmatpush1.msra.mxu0 0.0
    %1648 = vmatprep.subr.mxu0 0.0
    %1649 = vmatpush1.msra.mxu0 0.0
    %1650 = vmatprep.subr.mxu0 0.0
    %1651 = vmatpush1.msra.mxu0 0.0
    %1652 = vmatprep.subr.mxu0 0.0
    %1653 = vmatpush1.msra.mxu0 0.0
    %1654 = vmatprep.mubr.f32.mxu0 0.0
    %1655 = vmatmul.mubr.f32.gmra.mrb[0].mxu0 %v1588
    %v1656 = vpop.f32.mrb[0].mxu0
    %v1657 = vadd.f32 0.0, %v1656
    %v1658 = vpop.f32.mrb[0].mxu0
    %1659 = vdwg.mxu0
    %v1660 = vxor.u32 %v1657, 2147483648
    %v1661 = vmul.f32 %v1660, 1.442695
    %v1662 = vpow.pop %v1661
    %v1663 = vadd.f32 %v1662, 1.0
    %v1664 = vrcp.pop %v1663
    %v1665 = vmul.f32 1.0, %v1664
    %v1667 = vsel %vm197, %v1665, 0
    %1669 = vmatprep.subr.mxu0 0.0
    %1670 = vmatpush1.msra.mxu0 %v195
    %1671 = vmatprep.subr.mxu0 0.0
    %1672 = vmatpush1.msra.mxu0 %v1193
    %1673 = vmatprep.subr.mxu0 0.0
    %1674 = vmatpush1.msra.mxu0 0.0
    %1675 = vmatprep.subr.mxu0 0.0
    %1676 = vmatpush1.msra.mxu0 0.0
    %1677 = vmatprep.subr.mxu0 0.0
    %1678 = vmatpush1.msra.mxu0 0.0
    %1679 = vmatprep.subr.mxu0 0.0
    %1680 = vmatpush1.msra.mxu0 0.0
    %1681 = vmatprep.subr.mxu0 0.0
    %1682 = vmatpush1.msra.mxu0 0.0
    %1683 = vmatprep.subr.mxu0 0.0
    %1684 = vmatpush1.msra.mxu0 0.0
    %1685 = vmatprep.subr.mxu0 0.0
    %1686 = vmatpush1.msra.mxu0 0.0
    %1687 = vmatprep.subr.mxu0 0.0
    %1688 = vmatpush1.msra.mxu0 0.0
    %1689 = vmatprep.subr.mxu0 0.0
    %1690 = vmatpush1.msra.mxu0 0.0
    %1691 = vmatprep.subr.mxu0 0.0
    %1692 = vmatpush1.msra.mxu0 0.0
    %1693 = vmatprep.subr.mxu0 0.0
    %1694 = vmatpush1.msra.mxu0 0.0
    %1695 = vmatprep.subr.mxu0 0.0
    %1696 = vmatpush1.msra.mxu0 0.0
    %1697 = vmatprep.subr.mxu0 0.0
    %1698 = vmatpush1.msra.mxu0 0.0
    %1699 = vmatprep.subr.mxu0 0.0
    %1700 = vmatpush1.msra.mxu0 0.0
    %1701 = vmatprep.subr.mxu0 0.0
    %1702 = vmatpush1.msra.mxu0 0.0
    %1703 = vmatprep.subr.mxu0 0.0
    %1704 = vmatpush1.msra.mxu0 0.0
    %1705 = vmatprep.subr.mxu0 0.0
    %1706 = vmatpush1.msra.mxu0 0.0
    %1707 = vmatprep.subr.mxu0 0.0
    %1708 = vmatpush1.msra.mxu0 0.0
    %1709 = vmatprep.subr.mxu0 0.0
    %1710 = vmatpush1.msra.mxu0 0.0
    %1711 = vmatprep.subr.mxu0 0.0
    %1712 = vmatpush1.msra.mxu0 0.0
    %1713 = vmatprep.subr.mxu0 0.0
    %1714 = vmatpush1.msra.mxu0 0.0
    %1715 = vmatprep.subr.mxu0 0.0
    %1716 = vmatpush1.msra.mxu0 0.0
    %1717 = vmatprep.subr.mxu0 0.0
    %1718 = vmatpush1.msra.mxu0 0.0
    %1719 = vmatprep.subr.mxu0 0.0
    %1720 = vmatpush1.msra.mxu0 0.0
    %1721 = vmatprep.subr.mxu0 0.0
    %1722 = vmatpush1.msra.mxu0 0.0
    %1723 = vmatprep.subr.mxu0 0.0
    %1724 = vmatpush1.msra.mxu0 0.0
    %1725 = vmatprep.subr.mxu0 0.0
    %1726 = vmatpush1.msra.mxu0 0.0
    %1727 = vmatprep.subr.mxu0 0.0
    %1728 = vmatpush1.msra.mxu0 0.0
    %1729 = vmatprep.subr.mxu0 0.0
    %1730 = vmatpush1.msra.mxu0 0.0
    %1731 = vmatprep.subr.mxu0 0.0
    %1732 = vmatpush1.msra.mxu0 0.0
    %1733 = vmatprep.mubr.f32.mxu0 0.0
    %1734 = vmatmul.mubr.f32.gmra.mrb[0].mxu0 %v1667
    %v1735 = vpop.f32.mrb[0].mxu0
    %v1736 = vadd.f32 0.0, %v1735
    %v1737 = vpop.f32.mrb[0].mxu0
    %1738 = vdwg.mxu0
    %v1739 = vxor.u32 %v1736, 2147483648
    %v1740 = vmul.f32 %v1739, 1.442695
    %v1741 = vpow.pop %v1740
    %v1742 = vadd.f32 %v1741, 1.0
    %v1743 = vrcp.pop %v1742
    %v1744 = vmul.f32 1.0, %v1743
    %v1746 = vsel %vm197, %v1744, 0
    %1748 = vmatprep.subr.mxu0 0.0
    %1749 = vmatpush1.msra.mxu0 %v195
    %1750 = vmatprep.subr.mxu0 0.0
    %1751 = vmatpush1.msra.mxu0 %v1193
    %1752 = vmatprep.subr.mxu0 0.0
    %1753 = vmatpush1.msra.mxu0 0.0
    %1754 = vmatprep.subr.mxu0 0.0
    %1755 = vmatpush1.msra.mxu0 0.0
    %1756 = vmatprep.subr.mxu0 0.0
    %1757 = vmatpush1.msra.mxu0 0.0
    %1758 = vmatprep.subr.mxu0 0.0
    %1759 = vmatpush1.msra.mxu0 0.0
    %1760 = vmatprep.subr.mxu0 0.0
    %1761 = vmatpush1.msra.mxu0 0.0
    %1762 = vmatprep.subr.mxu0 0.0
    %1763 = vmatpush1.msra.mxu0 0.0
    %1764 = vmatprep.subr.mxu0 0.0
    %1765 = vmatpush1.msra.mxu0 0.0
    %1766 = vmatprep.subr.mxu0 0.0
    %1767 = vmatpush1.msra.mxu0 0.0
    %1768 = vmatprep.subr.mxu0 0.0
    %1769 = vmatpush1.msra.mxu0 0.0
    %1770 = vmatprep.subr.mxu0 0.0
    %1771 = vmatpush1.msra.mxu0 0.0
    %1772 = vmatprep.subr.mxu0 0.0
    %1773 = vmatpush1.msra.mxu0 0.0
    %1774 = vmatprep.subr.mxu0 0.0
    %1775 = vmatpush1.msra.mxu0 0.0
    %1776 = vmatprep.subr.mxu0 0.0
    %1777 = vmatpush1.msra.mxu0 0.0
    %1778 = vmatprep.subr.mxu0 0.0
    %1779 = vmatpush1.msra.mxu0 0.0
    %1780 = vmatprep.subr.mxu0 0.0
    %1781 = vmatpush1.msra.mxu0 0.0
    %1782 = vmatprep.subr.mxu0 0.0
    %1783 = vmatpush1.msra.mxu0 0.0
    %1784 = vmatprep.subr.mxu0 0.0
    %1785 = vmatpush1.msra.mxu0 0.0
    %1786 = vmatprep.subr.mxu0 0.0
    %1787 = vmatpush1.msra.mxu0 0.0
    %1788 = vmatprep.subr.mxu0 0.0
    %1789 = vmatpush1.msra.mxu0 0.0
    %1790 = vmatprep.subr.mxu0 0.0
    %1791 = vmatpush1.msra.mxu0 0.0
    %1792 = vmatprep.subr.mxu0 0.0
    %1793 = vmatpush1.msra.mxu0 0.0
    %1794 = vmatprep.subr.mxu0 0.0
    %1795 = vmatpush1.msra.mxu0 0.0
    %1796 = vmatprep.subr.mxu0 0.0
    %1797 = vmatpush1.msra.mxu0 0.0
    %1798 = vmatprep.subr.mxu0 0.0
    %1799 = vmatpush1.msra.mxu0 0.0
    %1800 = vmatprep.subr.mxu0 0.0
    %1801 = vmatpush1.msra.mxu0 0.0
    %1802 = vmatprep.subr.mxu0 0.0
    %1803 = vmatpush1.msra.mxu0 0.0
    %1804 = vmatprep.subr.mxu0 0.0
    %1805 = vmatpush1.msra.mxu0 0.0
    %1806 = vmatprep.subr.mxu0 0.0
    %1807 = vmatpush1.msra.mxu0 0.0
    %1808 = vmatprep.subr.mxu0 0.0
    %1809 = vmatpush1.msra.mxu0 0.0
    %1810 = vmatprep.subr.mxu0 0.0
    %1811 = vmatpush1.msra.mxu0 0.0
    %1812 = vmatprep.mubr.f32.mxu0 0.0
    %1813 = vmatmul.mubr.f32.gmra.mrb[0].mxu0 %v1746
    %v1814 = vpop.f32.mrb[0].mxu0
    %v1815 = vadd.f32 0.0, %v1814
    %v1816 = vpop.f32.mrb[0].mxu0
    %1817 = vdwg.mxu0
    %v1818 = vxor.u32 %v1815, 2147483648
    %v1819 = vmul.f32 %v1818, 1.442695
    %v1820 = vpow.pop %v1819
    %v1821 = vadd.f32 %v1820, 1.0
    %v1822 = vrcp.pop %v1821
    %v1823 = vmul.f32 1.0, %v1822
    %v1825 = vsel %vm197, %v1823, 0
    %1827 = vmatprep.subr.mxu0 0.0
    %1828 = vmatpush1.msra.mxu0 %v195
    %1829 = vmatprep.subr.mxu0 0.0
    %1830 = vmatpush1.msra.mxu0 %v1193
    %1831 = vmatprep.subr.mxu0 0.0
    %1832 = vmatpush1.msra.mxu0 0.0
    %1833 = vmatprep.subr.mxu0 0.0
    %1834 = vmatpush1.msra.mxu0 0.0
    %1835 = vmatprep.subr.mxu0 0.0
    %1836 = vmatpush1.msra.mxu0 0.0
    %1837 = vmatprep.subr.mxu0 0.0
    %1838 = vmatpush1.msra.mxu0 0.0
    %1839 = vmatprep.subr.mxu0 0.0
    %1840 = vmatpush1.msra.mxu0 0.0
    %1841 = vmatprep.subr.mxu0 0.0
    %1842 = vmatpush1.msra.mxu0 0.0
    %1843 = vmatprep.subr.mxu0 0.0
    %1844 = vmatpush1.msra.mxu0 0.0
    %1845 = vmatprep.subr.mxu0 0.0
    %1846 = vmatpush1.msra.mxu0 0.0
    %1847 = vmatprep.subr.mxu0 0.0
    %1848 = vmatpush1.msra.mxu0 0.0
    %1849 = vmatprep.subr.mxu0 0.0
    %1850 = vmatpush1.msra.mxu0 0.0
    %1851 = vmatprep.subr.mxu0 0.0
    %1852 = vmatpush1.msra.mxu0 0.0
    %1853 = vmatprep.subr.mxu0 0.0
    %1854 = vmatpush1.msra.mxu0 0.0
    %1855 = vmatprep.subr.mxu0 0.0
    %1856 = vmatpush1.msra.mxu0 0.0
    %1857 = vmatprep.subr.mxu0 0.0
    %1858 = vmatpush1.msra.mxu0 0.0
    %1859 = vmatprep.subr.mxu0 0.0
    %1860 = vmatpush1.msra.mxu0 0.0
    %1861 = vmatprep.subr.mxu0 0.0
    %1862 = vmatpush1.msra.mxu0 0.0
    %1863 = vmatprep.subr.mxu0 0.0
    %1864 = vmatpush1.msra.mxu0 0.0
    %1865 = vmatprep.subr.mxu0 0.0
    %1866 = vmatpush1.msra.mxu0 0.0
    %1867 = vmatprep.subr.mxu0 0.0
    %1868 = vmatpush1.msra.mxu0 0.0
    %1869 = vmatprep.subr.mxu0 0.0
    %1870 = vmatpush1.msra.mxu0 0.0
    %1871 = vmatprep.subr.mxu0 0.0
    %1872 = vmatpush1.msra.mxu0 0.0
    %1873 = vmatprep.subr.mxu0 0.0
    %1874 = vmatpush1.msra.mxu0 0.0
    %1875 = vmatprep.subr.mxu0 0.0
    %1876 = vmatpush1.msra.mxu0 0.0
    %1877 = vmatprep.subr.mxu0 0.0
    %1878 = vmatpush1.msra.mxu0 0.0
    %1879 = vmatprep.subr.mxu0 0.0
    %1880 = vmatpush1.msra.mxu0 0.0
    %1881 = vmatprep.subr.mxu0 0.0
    %1882 = vmatpush1.msra.mxu0 0.0
    %1883 = vmatprep.subr.mxu0 0.0
    %1884 = vmatpush1.msra.mxu0 0.0
    %1885 = vmatprep.subr.mxu0 0.0
    %1886 = vmatpush1.msra.mxu0 0.0
    %1887 = vmatprep.subr.mxu0 0.0
    %1888 = vmatpush1.msra.mxu0 0.0
    %1889 = vmatprep.subr.mxu0 0.0
    %1890 = vmatpush1.msra.mxu0 0.0
    %1891 = vmatprep.mubr.f32.mxu0 0.0
    %1892 = vmatmul.mubr.f32.gmra.mrb[0].mxu0 %v1825
    %v1893 = vpop.f32.mrb[0].mxu0
    %v1894 = vadd.f32 0.0, %v1893
    %v1895 = vpop.f32.mrb[0].mxu0
    %1896 = vdwg.mxu0
    %v1897 = vxor.u32 %v1894, 2147483648
    %v1898 = vmul.f32 %v1897, 1.442695
    %v1899 = vpow.pop %v1898
    %v1900 = vadd.f32 %v1899, 1.0
    %v1901 = vrcp.pop %v1900
    %v1902 = vmul.f32 1.0, %v1901
    %v1903 = vrot.slane %v1270, 7
    %v1905 = vrot.slane %v1349, 6
    %v1907 = vrot.slane %v1428, 5
    %v1909 = vrot.slane %v1507, 4
    %v1911 = vrot.slane %v1586, 3
    %v1913 = vrot.slane %v1665, 2
    %v1915 = vrot.slane %v1744, 1
    %v1918 = vrot.slane %v1902, 7
    %vm1920 = vcmask 1040384
    %v1921 = vsel %vm1920, %v1188, %v1903
    %v1922 = vsel %vm32, %v1921, %v1905
    %vm1923 = vcmask 1042432
    %v1924 = vsel %vm1923, %v1922, %v1907
    %vm1925 = vcmask 1043456
    %v1926 = vsel %vm1925, %v1924, %v1909
    %vm1927 = vcmask 1044480
    %v1928 = vsel %vm1927, %v1926, %v1911
    %vm1929 = vcmask 1045504
    %v1930 = vsel %vm1929, %v1928, %v1913
    %v1931 = vsel %vm201, %v1930, %v1915
    %v1932 = vsel %vm1920, %v1823, %v1918
    %v1934 = vsel %vm197, %v1931, 0
    %v1937 = vsel %vm197, %v1932, 0
    %v1939 = vsel %vm201, %v23, 0
    %1941 = vmatprep.subr.mxu0 0.0
    %1942 = vmatpush1.msra.mxu0 %v22
    %1943 = vmatprep.subr.mxu0 0.0
    %1944 = vmatpush1.msra.mxu0 %v1939
    %1945 = vmatprep.subr.mxu0 0.0
    %1946 = vmatpush1.msra.mxu0 0.0
    %1947 = vmatprep.subr.mxu0 0.0
    %1948 = vmatpush1.msra.mxu0 0.0
    %1949 = vmatprep.subr.mxu0 0.0
    %1950 = vmatpush1.msra.mxu0 0.0
    %1951 = vmatprep.subr.mxu0 0.0
    %1952 = vmatpush1.msra.mxu0 0.0
    %1953 = vmatprep.subr.mxu0 0.0
    %1954 = vmatpush1.msra.mxu0 0.0
    %1955 = vmatprep.subr.mxu0 0.0
    %1956 = vmatpush1.msra.mxu0 0.0
    %1957 = vmatprep.subr.mxu0 0.0
    %1958 = vmatpush1.msra.mxu0 0.0
    %1959 = vmatprep.subr.mxu0 0.0
    %1960 = vmatpush1.msra.mxu0 0.0
    %1961 = vmatprep.subr.mxu0 0.0
    %1962 = vmatpush1.msra.mxu0 0.0
    %1963 = vmatprep.subr.mxu0 0.0
    %1964 = vmatpush1.msra.mxu0 0.0
    %1965 = vmatprep.subr.mxu0 0.0
    %1966 = vmatpush1.msra.mxu0 0.0
    %1967 = vmatprep.subr.mxu0 0.0
    %1968 = vmatpush1.msra.mxu0 0.0
    %1969 = vmatprep.subr.mxu0 0.0
    %1970 = vmatpush1.msra.mxu0 0.0
    %1971 = vmatprep.subr.mxu0 0.0
    %1972 = vmatpush1.msra.mxu0 0.0
    %1973 = vmatprep.subr.mxu0 0.0
    %1974 = vmatpush1.msra.mxu0 0.0
    %1975 = vmatprep.subr.mxu0 0.0
    %1976 = vmatpush1.msra.mxu0 0.0
    %1977 = vmatprep.subr.mxu0 0.0
    %1978 = vmatpush1.msra.mxu0 0.0
    %1979 = vmatprep.subr.mxu0 0.0
    %1980 = vmatpush1.msra.mxu0 0.0
    %1981 = vmatprep.subr.mxu0 0.0
    %1982 = vmatpush1.msra.mxu0 0.0
    %1983 = vmatprep.subr.mxu0 0.0
    %1984 = vmatpush1.msra.mxu0 0.0
    %1985 = vmatprep.subr.mxu0 0.0
    %1986 = vmatpush1.msra.mxu0 0.0
    %1987 = vmatprep.subr.mxu0 0.0
    %1988 = vmatpush1.msra.mxu0 0.0
    %1989 = vmatprep.subr.mxu0 0.0
    %1990 = vmatpush1.msra.mxu0 0.0
    %1991 = vmatprep.subr.mxu0 0.0
    %1992 = vmatpush1.msra.mxu0 0.0
    %1993 = vmatprep.subr.mxu0 0.0
    %1994 = vmatpush1.msra.mxu0 0.0
    %1995 = vmatprep.subr.mxu0 0.0
    %1996 = vmatpush1.msra.mxu0 0.0
    %1997 = vmatprep.subr.mxu0 0.0
    %1998 = vmatpush1.msra.mxu0 0.0
    %1999 = vmatprep.subr.mxu0 0.0
    %2000 = vmatpush1.msra.mxu0 0.0
    %2001 = vmatprep.subr.mxu0 0.0
    %2002 = vmatpush1.msra.mxu0 0.0
    %2003 = vmatprep.subr.mxu0 0.0
    %2004 = vmatpush1.msra.mxu0 0.0
    %2005 = vmatprep.mubr.f32.mxu0 0.0
    %2006 = vmatmul.mubr.f32.gmra.mrb[0].mxu0 %v1934
    %v2007 = vpop.f32.mrb[0].mxu0
    %v2008 = vadd.f32 0.0, %v2007
    %v2009 = vpop.f32.mrb[0].mxu0
    %2010 = vmatprep.mubr.f32.mxu0 0.0
    %2011 = vmatmul.mubr.f32.gmra.mrb[0].mxu0 %v1937
    %v2012 = vpop.f32.mrb[0].mxu0
    %v2013 = vadd.f32 0.0, %v2012
    %v2014 = vpop.f32.mrb[0].mxu0
    %2015 = vdwg.mxu0
    %2016 = vst.msk [vmem:[#allocation2] sm:$0xff] %vm25, %v2008
    %vm2017 = vcmask 74752
    %2018 = vst.msk [vmem:[#allocation2 + $0x8] sm:$0x3] %vm2017, %v2013
    // Predicated region
    $region10: #{tpu_custom_call.1} parent=1 // pred_check
      _
    $region11: #{tpu_custom_call.1} parent=1 // pred_check_branch
      %2020 = sbr.rel (0) target = $region13
    $region12: #{tpu_custom_call.1} parent=1 // pred_region
      %s2022 = ssub.s32 256, 256
      %2023 = vsyncadd [#allocation3], %s2022
      %s2024 = sshll.u32 [#allocation2], 4
      %s2025 = int_to_ptr.vmem [resolvable:$true] %s2024
      %2030 = dma.vmem_to_hbm [thread:$0]  %s2025, 256, %s2, [#allocation3], 128, 128, 8
    $region13: #{tpu_custom_call.1} parent=1 // pred_fallthru
      _
    // Predicated region
    $region14: #{tpu_custom_call.1} parent=1 // pred_check
      _
    $region15: #{tpu_custom_call.1} parent=1 // pred_check_branch
      %2032 = sbr.rel (0) target = $region17
    $region16: #{tpu_custom_call.1} parent=1 // pred_region
      %2033 = dma.done [#allocation3], 256
    $region17: #{tpu_custom_call.1} parent=1 // pred_fallthru
      _
    %2034 = vsyncpa [#allocation3], 1

</llo_original>
